<compile_context>
chip_gen: v7x
topology: tpu7x:2x2x1
jax: 0.10.0
libtpu: 0.0.40
codegen_flags: <defaults>
</compile_context>

<pallas_src>
import functools
import math

import jax
import jax.numpy as jnp
from jax.experimental import pallas as pl
from jax.experimental.pallas import tpu as pltpu


# ----------------------------------------------------------------------------
# Kernel helpers
# ----------------------------------------------------------------------------
def _layer_norm(v, g, b, eps=1e-5):
    # Two-pass (mean, centered variance): avoids E[x^2]-E[x]^2 cancellation.
    mu = jnp.mean(v, axis=-1, keepdims=True)
    c = v - mu
    var = jnp.mean(c * c, axis=-1, keepdims=True)
    return c * jax.lax.rsqrt(var + eps) * g + b


# ----------------------------------------------------------------------------
# Fused model kernel: grid = (row_tiles [parallel], n_blocks [arbitrary])
# ----------------------------------------------------------------------------
def fused_model_kernel(
    x_ref,
    fw_ref, fb_ref,
    wq_ref, bq_ref, wk_ref, bk_ref, wv_ref, bv_ref,
    wo_ref, bo_ref,
    g1_ref, be1_ref,
    wf1_ref, bf1_ref, wf2_ref, bf2_ref,
    g2_ref, be2_ref,
    lw_ref, lb_ref,
    o_ref,
    h_scr,
    *, n_blocks, n_head, seq, batch_tile, compute_dtype, approx_softmax,
):
    cd = compute_dtype
    blk = pl.program_id(1)

    # ---- first Linear (only once per row tile) -------------------------------
    @pl.when(blk == 0)
    def _():
        x = x_ref[...]
        h_scr[...] = (jnp.dot(x.astype(cd), fw_ref[...],
                              preferred_element_type=jnp.float32) + fb_ref[...])

    h = h_scr[...]                                   # [TM, D] f32 (carried)
    hc = h.astype(cd)
    d_model = h.shape[-1]
    dh = d_model // n_head

    # ---- full-width QKV projections on flattened rows ------------------------
    # (1/sqrt(dh) scale is already folded into wq / bq by the wrapper.)
    q = jnp.dot(hc, wq_ref[...], preferred_element_type=jnp.float32) + bq_ref[...]
    k = jnp.dot(hc, wk_ref[...], preferred_element_type=jnp.float32) + bk_ref[...]
    v = jnp.dot(hc, wv_ref[...], preferred_element_type=jnp.float32) + bv_ref[...]

    # Leading-dim split only (minor dims preserved): [TM, D] -> [bt, S, D].
    q3 = q.reshape(batch_tile, seq, d_model)
    k3 = k.reshape(batch_tile, seq, d_model)
    v3 = v.reshape(batch_tile, seq, d_model)

    # ---- per-head softmax attention (batched over the row-tile batch) --------
    av_parts = []
    for hh in range(n_head):
        sl = slice(hh * dh, (hh + 1) * dh)
        qh = q3[:, :, sl].astype(cd)                 # [bt, S, dh]
        kh = k3[:, :, sl].astype(cd)
        vh = v3[:, :, sl].astype(cd)
        s = jnp.einsum("bqd,bkd->bqk", qh, kh,
                       preferred_element_type=jnp.float32)      # [bt, S, S]
        s = s - jnp.max(s, axis=-1, keepdims=True)
        p = jnp.exp(s)
        p = p * pl.reciprocal(jnp.sum(p, axis=-1, keepdims=True),
                              approx=approx_softmax)
        av_parts.append(jnp.einsum("bqk,bkd->bqd", p.astype(cd), vh,
                                   preferred_element_type=jnp.float32))
    av = jnp.concatenate(av_parts, axis=-1)          # [bt, S, D] (head-major lanes)
    av = av.reshape(batch_tile * seq, d_model)       # [TM, D]

    # ---- single full-width output projection (unsplit Wo) --------------------
    attn = jnp.dot(av.astype(cd), wo_ref[...],
                   preferred_element_type=jnp.float32) + bo_ref[...]

    # ---- post-norm residual 1 -------------------------------------------------
    y = _layer_norm(h + attn, g1_ref[...], be1_ref[...])

    # ---- feed-forward (ReLU), flattened rows ---------------------------------
    f = jnp.dot(y.astype(cd), wf1_ref[...],
                preferred_element_type=jnp.float32) + bf1_ref[...]
    f = jnp.maximum(f, 0.0)
    f = jnp.dot(f.astype(cd), wf2_ref[...],
                preferred_element_type=jnp.float32) + bf2_ref[...]

    # ---- post-norm residual 2 -------------------------------------------------
    h_new = _layer_norm(y + f, g2_ref[...], be2_ref[...])
    h_scr[...] = h_new

    # ---- last Linear (only once per row tile, after the final block) ---------
    @pl.when(blk == n_blocks - 1)
    def _():
        o_ref[...] = (jnp.dot(h_new.astype(cd), lw_ref[...],
                              preferred_element_type=jnp.float32) + lb_ref[...])


# ----------------------------------------------------------------------------
# Wrapper: weight repacking + single pallas_call
# ----------------------------------------------------------------------------
def _pick_batch_tile(B, S):
    # Divisors of B whose row tile is sublane-aligned (or covers everything).
    cands = [d for d in range(1, B + 1)
             if B % d == 0 and ((d * S) % 8 == 0 or d == B)]
    if not cands:
        return B
    target = max(1, -(-128 // S))                    # aim for >= 128 rows / step
    multi = [d for d in cands if B // d >= 2]        # >= 2 parallel steps (v7x)
    pool = multi if multi else cands
    geq = [d for d in pool if d >= target]
    return min(geq) if geq else max(pool)


def model_blocks_forward(params, x, n_head, *, batch_tile=None,
                         compute_dtype=jnp.float32, approx_softmax=False):
    B, S, Din = x.shape
    blocks = params["blocks"]
    n_blocks = len(blocks)
    D = params["first_w"].shape[1]
    dh = D // n_head
    scale = 1.0 / math.sqrt(dh)
    cd = compute_dtype

    # Stack per-block params along a leading n_blocks axis (indexed by the
    # block grid axis).  Matmul weights are pre-cast to compute_dtype here
    # (halves weight DMA / VMEM when bf16 is used); biases & LN params stay f32.
    stk = lambda name: jnp.stack([blk[name] for blk in blocks])
    wq = (stk("wq") * scale).astype(cd)              # scale folded into wq / bq
    bq = stk("bq") * scale
    wk = stk("wk").astype(cd); bk = stk("bk")
    wv = stk("wv").astype(cd); bv = stk("bv")
    wo = stk("wo").astype(cd); bo = stk("bo")
    g1, be1 = stk("ln1_g"), stk("ln1_b")
    wf1 = stk("wf1").astype(cd); bf1 = stk("bf1")
    wf2 = stk("wf2").astype(cd); bf2 = stk("bf2")
    g2, be2 = stk("ln2_g"), stk("ln2_b")
    fw = params["first_w"].astype(cd); fb = params["first_b"]
    lw = params["last_w"].astype(cd);  lb = params["last_b"]
    d_out = lw.shape[1]
    n_ff = wf1.shape[-1]

    # Row tiling over the flattened (B*S) axis, batch-aligned.
    if batch_tile is None:
        batch_tile = _pick_batch_tile(B, S)
    assert B % batch_tile == 0, "batch_tile must divide batch"
    tm = batch_tile * S
    grid = (B // batch_tile, n_blocks)

    # BlockSpecs: x / out indexed by the row axis only (resident across blocks);
    # per-block weights indexed by the block axis (one block in VMEM at a time,
    # next block prefetched); first/last Linear weights constant.
    def per_block_spec(a):
        return pl.BlockSpec((None,) + a.shape[1:], lambda i, k: (k, 0, 0))

    def const_spec(a):
        nd = a.ndim
        return pl.BlockSpec(a.shape, lambda i, k, _n=nd: (0,) * _n)

    weights = [fw, fb, wq, bq, wk, bk, wv, bv, wo, bo,
               g1, be1, wf1, bf1, wf2, bf2, g2, be2, lw, lb]
    in_specs = ([pl.BlockSpec((tm, Din), lambda i, k: (i, 0)),
                 const_spec(fw), const_spec(fb)]
                + [per_block_spec(w) for w in
                   (wq, bq, wk, bk, wv, bv, wo, bo,
                    g1, be1, wf1, bf1, wf2, bf2, g2, be2)]
                + [const_spec(lw), const_spec(lb)])
    out_specs = pl.BlockSpec((tm, d_out), lambda i, k: (i, 0))

    # Explicit scoped-VMEM budget: I/O tiles (double-buffered), one block's
    # weights (double-buffered for prefetch), constants, intermediates, 2x headroom.
    wsz = jnp.dtype(cd).itemsize
    per_block_bytes = (4 * D * D + 2 * D * n_ff) * wsz + (6 * D + n_ff + 4 * D) * 4
    const_bytes = (Din * D + D * d_out) * wsz + (D + d_out) * 4
    act_bytes = (8 * tm * D + tm * n_ff + 3 * batch_tile * S * S) * 4
    io_bytes = (2 * tm * Din + 2 * tm * d_out + tm * D) * 4
    est = 2 * per_block_bytes + 2 * const_bytes + act_bytes + io_bytes
    vmem_limit = int(min(max(32 * 2**20, 2 * est), 64 * 2**20))

    kernel = functools.partial(
        fused_model_kernel,
        n_blocks=n_blocks, n_head=n_head, seq=S, batch_tile=batch_tile,
        compute_dtype=cd, approx_softmax=approx_softmax)

    out = pl.pallas_call(
        kernel,
        out_shape=jax.ShapeDtypeStruct((B * S, d_out), jnp.float32),
        grid=grid,
        in_specs=in_specs,
        out_specs=out_specs,
        scratch_shapes=[pltpu.VMEM((tm, D), jnp.float32)],   # carried activations
        compiler_params=pltpu.CompilerParams(
            dimension_semantics=("parallel", "arbitrary"),
            vmem_limit_bytes=vmem_limit),
    )(x.reshape(B * S, Din), *weights)

    return out.reshape(B, S, d_out)


# ----------------------------------------------------------------------------
# Deterministic parameter init (synthetic, no checkpoint)
# ----------------------------------------------------------------------------
def init_params(key, dimension, dim_emb, n_ff, n_blocks):
    def dense(k, fan_in, fan_out):
        kw, kb = jax.random.split(k)
        w = jax.random.normal(kw, (fan_in, fan_out), jnp.float32) / jnp.sqrt(
            jnp.float32(fan_in))
        b = 0.01 * jax.random.normal(kb, (1, fan_out), jnp.float32)
        return w, b

    keys = jax.random.split(key, 2 + n_blocks)
    params = {}
    params["first_w"], params["first_b"] = dense(keys[0], dimension, dim_emb)
    params["last_w"], params["last_b"] = dense(keys[1], dim_emb, dimension)
    blocks = []
    for i in range(n_blocks):
        ks = jax.random.split(keys[2 + i], 6)
        blk = {}
        blk["wq"], blk["bq"] = dense(ks[0], dim_emb, dim_emb)
        blk["wk"], blk["bk"] = dense(ks[1], dim_emb, dim_emb)
        blk["wv"], blk["bv"] = dense(ks[2], dim_emb, dim_emb)
        blk["wo"], blk["bo"] = dense(ks[3], dim_emb, dim_emb)
        blk["wf1"], blk["bf1"] = dense(ks[4], dim_emb, n_ff)
        blk["wf2"], blk["bf2"] = dense(ks[5], n_ff, dim_emb)
        blk["ln1_g"] = jnp.ones((1, dim_emb), jnp.float32)
        blk["ln1_b"] = jnp.zeros((1, dim_emb), jnp.float32)
        blk["ln2_g"] = jnp.ones((1, dim_emb), jnp.float32)
        blk["ln2_b"] = jnp.zeros((1, dim_emb), jnp.float32)
        blocks.append(blk)
    params["blocks"] = blocks
    return params


# ----------------------------------------------------------------------------
# Pure-JAX reference (same math) for a sanity check
# ----------------------------------------------------------------------------
def reference_forward(params, x, n_head):
    def ln(v, g, b):
        mu = jnp.mean(v, axis=-1, keepdims=True)
        var = jnp.mean((v - mu) ** 2, axis=-1, keepdims=True)
        return (v - mu) * jax.lax.rsqrt(var + 1e-5) * g + b

    h = x @ params["first_w"] + params["first_b"]
    for blk in params["blocks"]:
        d = h.shape[-1]
        dh = d // n_head
        q = h @ blk["wq"] + blk["bq"]
        k = h @ blk["wk"] + blk["bk"]
        v = h @ blk["wv"] + blk["bv"]
        outs = []
        for hh in range(n_head):
            qh = q[..., hh * dh:(hh + 1) * dh]
            kh = k[..., hh * dh:(hh + 1) * dh]
            vh = v[..., hh * dh:(hh + 1) * dh]
            s = jnp.einsum("bqd,bkd->bqk", qh, kh) / jnp.sqrt(jnp.float32(dh))
            p = jax.nn.softmax(s, axis=-1)
            outs.append(jnp.einsum("bqk,bkd->bqd", p, vh))
        attn = jnp.concatenate(outs, axis=-1) @ blk["wo"] + blk["bo"]
        y = ln(h + attn, blk["ln1_g"], blk["ln1_b"])
        f = jnp.maximum(y @ blk["wf1"] + blk["bf1"], 0.0) @ blk["wf2"] + blk["bf2"]
        h = ln(y + f, blk["ln2_g"], blk["ln2_b"])
    return h @ params["last_w"] + params["last_b"]


if __name__ == "__main__":
    # Small shapes consistent with the module's forward.
    batch, seq = 2, 8
    dimension, dim_emb, n_head, n_blocks, n_ff = 4, 32, 4, 2, 64

    key = jax.random.PRNGKey(0)
    kx, kp = jax.random.split(key)
    x = jax.random.normal(kx, (batch, seq, dimension), jnp.float32)
    params = init_params(kp, dimension, dim_emb, n_ff, n_blocks)

    out = model_blocks_forward(params, x, n_head)
    out = jax.block_until_ready(out)

    ref = reference_forward(params, x, n_head)
    assert out.shape == (batch, seq, dimension)
    assert jnp.allclose(out, ref, atol=5e-3, rtol=5e-3)

    print("KERNEL_OK")
</pallas_src>

<mosaic_0001>
module attributes {stable_mosaic.version = 11 : i64} {
  func.func @fused_model_kernel(%arg0: i32, %arg1: i32, %arg2: memref<8x4xf32, #tpu.memory_space<vmem>>, %arg3: memref<4x32xf32, #tpu.memory_space<vmem>>, %arg4: memref<1x32xf32, #tpu.memory_space<vmem>>, %arg5: memref<1x32x32xf32, #tpu.memory_space<vmem>>, %arg6: memref<1x1x32xf32, #tpu.memory_space<vmem>>, %arg7: memref<1x32x32xf32, #tpu.memory_space<vmem>>, %arg8: memref<1x1x32xf32, #tpu.memory_space<vmem>>, %arg9: memref<1x32x32xf32, #tpu.memory_space<vmem>>, %arg10: memref<1x1x32xf32, #tpu.memory_space<vmem>>, %arg11: memref<1x32x32xf32, #tpu.memory_space<vmem>>, %arg12: memref<1x1x32xf32, #tpu.memory_space<vmem>>, %arg13: memref<1x1x32xf32, #tpu.memory_space<vmem>>, %arg14: memref<1x1x32xf32, #tpu.memory_space<vmem>>, %arg15: memref<1x32x64xf32, #tpu.memory_space<vmem>>, %arg16: memref<1x1x64xf32, #tpu.memory_space<vmem>>, %arg17: memref<1x64x32xf32, #tpu.memory_space<vmem>>, %arg18: memref<1x1x32xf32, #tpu.memory_space<vmem>>, %arg19: memref<1x1x32xf32, #tpu.memory_space<vmem>>, %arg20: memref<1x1x32xf32, #tpu.memory_space<vmem>>, %arg21: memref<32x4xf32, #tpu.memory_space<vmem>>, %arg22: memref<1x4xf32, #tpu.memory_space<vmem>>, %arg23: memref<8x4xf32, #tpu.memory_space<vmem>>, %arg24: memref<8x32xf32, #tpu.memory_space<vmem>>) attributes {dimension_semantics = [#tpu.dimension_semantics<parallel>, #tpu.dimension_semantics<arbitrary>], iteration_bounds = array<i64: 2, 2>, scalar_prefetch = 0 : i64, scratch_operands = 1 : i64, tpu.core_type = #tpu.core_type<tc>, window_params = [{transform_indices = @transform_0, window_bounds = array<i64: 8, 4>}, {pipeline_mode = #tpu.pipeline_mode<synchronous>, transform_indices = @transform_1, window_bounds = array<i64: 4, 32>}, {pipeline_mode = #tpu.pipeline_mode<synchronous>, transform_indices = @transform_2, window_bounds = array<i64: 1, 32>}, {transform_indices = @transform_3, window_bounds = array<i64: 1, 32, 32>}, {transform_indices = @transform_4, window_bounds = array<i64: 1, 1, 32>}, {transform_indices = @transform_5, window_bounds = array<i64: 1, 32, 32>}, {transform_indices = @transform_6, window_bounds = array<i64: 1, 1, 32>}, {transform_indices = @transform_7, window_bounds = array<i64: 1, 32, 32>}, {transform_indices = @transform_8, window_bounds = array<i64: 1, 1, 32>}, {transform_indices = @transform_9, window_bounds = array<i64: 1, 32, 32>}, {transform_indices = @transform_10, window_bounds = array<i64: 1, 1, 32>}, {transform_indices = @transform_11, window_bounds = array<i64: 1, 1, 32>}, {transform_indices = @transform_12, window_bounds = array<i64: 1, 1, 32>}, {transform_indices = @transform_13, window_bounds = array<i64: 1, 32, 64>}, {transform_indices = @transform_14, window_bounds = array<i64: 1, 1, 64>}, {transform_indices = @transform_15, window_bounds = array<i64: 1, 64, 32>}, {transform_indices = @transform_16, window_bounds = array<i64: 1, 1, 32>}, {transform_indices = @transform_17, window_bounds = array<i64: 1, 1, 32>}, {transform_indices = @transform_18, window_bounds = array<i64: 1, 1, 32>}, {pipeline_mode = #tpu.pipeline_mode<synchronous>, transform_indices = @transform_19, window_bounds = array<i64: 32, 4>}, {pipeline_mode = #tpu.pipeline_mode<synchronous>, transform_indices = @transform_20, window_bounds = array<i64: 1, 4>}, {transform_indices = @transform_21, window_bounds = array<i64: 8, 4>}]} {
    %c0_i32 = arith.constant 0 : i32
    %0 = arith.cmpi eq, %arg1, %c0_i32 : i32
    %1 = arith.extui %0 : i1 to i32
    %c0_i32_0 = arith.constant 0 : i32
    %2 = arith.cmpi ne, %1, %c0_i32_0 : i32
    scf.if %2 {
      %c0_85 = arith.constant 0 : index
      %c0_86 = arith.constant 0 : index
      %167 = vector.load %arg2[%c0_85, %c0_86] : memref<8x4xf32, #tpu.memory_space<vmem>>, vector<8x4xf32>
      %c0_87 = arith.constant 0 : index
      %c0_88 = arith.constant 0 : index
      %168 = vector.load %arg3[%c0_87, %c0_88] : memref<4x32xf32, #tpu.memory_space<vmem>>, vector<4x32xf32>
      %cst_89 = arith.constant dense<0.000000e+00> : vector<8x32xf32>
      %169 = tpu.matmul %167, %168, %cst_89 {dimension_numbers = #tpu.dot_dimension_numbers<[1], [0], [0], [1], [0, 0, 1, 1], [], []>} : vector<8x4xf32>, vector<4x32xf32>, vector<8x32xf32> -> vector<8x32xf32>
      %c0_90 = arith.constant 0 : index
      %c0_91 = arith.constant 0 : index
      %170 = vector.load %arg4[%c0_90, %c0_91] : memref<1x32xf32, #tpu.memory_space<vmem>>, vector<1x32xf32>
      %171 = vector.broadcast %170 : vector<1x32xf32> to vector<8x32xf32>
      %172 = arith.addf %169, %171 : vector<8x32xf32>
      %c0_92 = arith.constant 0 : index
      %c0_93 = arith.constant 0 : index
      %173 = vector.load %arg24[%c0_92, %c0_93] : memref<8x32xf32, #tpu.memory_space<vmem>>, vector<8x32xf32>
      tpu.vector_store %arg24[%c0_92, %c0_93], %172 {strides = array<i32>} : memref<8x32xf32, #tpu.memory_space<vmem>>, vector<8x32xf32>,
    } else {
    }
    %c0 = arith.constant 0 : index
    %c0_1 = arith.constant 0 : index
    %3 = vector.load %arg24[%c0, %c0_1] : memref<8x32xf32, #tpu.memory_space<vmem>>, vector<8x32xf32>
    %c0_2 = arith.constant 0 : index
    %c0_3 = arith.constant 0 : index
    %c0_4 = arith.constant 0 : index
    %4 = vector.load %arg5[%c0_2, %c0_3, %c0_4] : memref<1x32x32xf32, #tpu.memory_space<vmem>>, vector<1x32x32xf32>
    %5 = vector.shape_cast %4 : vector<1x32x32xf32> to vector<32x32xf32>
    %cst = arith.constant dense<0.000000e+00> : vector<8x32xf32>
    %6 = tpu.matmul %3, %5, %cst {dimension_numbers = #tpu.dot_dimension_numbers<[1], [0], [0], [1], [0, 0, 1, 1], [], []>} : vector<8x32xf32>, vector<32x32xf32>, vector<8x32xf32> -> vector<8x32xf32>
    %c0_5 = arith.constant 0 : index
    %c0_6 = arith.constant 0 : index
    %c0_7 = arith.constant 0 : index
    %7 = vector.load %arg6[%c0_5, %c0_6, %c0_7] : memref<1x1x32xf32, #tpu.memory_space<vmem>>, vector<1x1x32xf32>
    %8 = vector.shape_cast %7 : vector<1x1x32xf32> to vector<1x32xf32>
    %9 = vector.broadcast %8 : vector<1x32xf32> to vector<8x32xf32>
    %10 = arith.addf %6, %9 : vector<8x32xf32>
    %c0_8 = arith.constant 0 : index
    %c0_9 = arith.constant 0 : index
    %c0_10 = arith.constant 0 : index
    %11 = vector.load %arg7[%c0_8, %c0_9, %c0_10] : memref<1x32x32xf32, #tpu.memory_space<vmem>>, vector<1x32x32xf32>
    %12 = vector.shape_cast %11 : vector<1x32x32xf32> to vector<32x32xf32>
    %cst_11 = arith.constant dense<0.000000e+00> : vector<8x32xf32>
    %13 = tpu.matmul %3, %12, %cst_11 {dimension_numbers = #tpu.dot_dimension_numbers<[1], [0], [0], [1], [0, 0, 1, 1], [], []>} : vector<8x32xf32>, vector<32x32xf32>, vector<8x32xf32> -> vector<8x32xf32>
    %c0_12 = arith.constant 0 : index
    %c0_13 = arith.constant 0 : index
    %c0_14 = arith.constant 0 : index
    %14 = vector.load %arg8[%c0_12, %c0_13, %c0_14] : memref<1x1x32xf32, #tpu.memory_space<vmem>>, vector<1x1x32xf32>
    %15 = vector.shape_cast %14 : vector<1x1x32xf32> to vector<1x32xf32>
    %16 = vector.broadcast %15 : vector<1x32xf32> to vector<8x32xf32>
    %17 = arith.addf %13, %16 : vector<8x32xf32>
    %c0_15 = arith.constant 0 : index
    %c0_16 = arith.constant 0 : index
    %c0_17 = arith.constant 0 : index
    %18 = vector.load %arg9[%c0_15, %c0_16, %c0_17] : memref<1x32x32xf32, #tpu.memory_space<vmem>>, vector<1x32x32xf32>
    %19 = vector.shape_cast %18 : vector<1x32x32xf32> to vector<32x32xf32>
    %cst_18 = arith.constant dense<0.000000e+00> : vector<8x32xf32>
    %20 = tpu.matmul %3, %19, %cst_18 {dimension_numbers = #tpu.dot_dimension_numbers<[1], [0], [0], [1], [0, 0, 1, 1], [], []>} : vector<8x32xf32>, vector<32x32xf32>, vector<8x32xf32> -> vector<8x32xf32>
    %c0_19 = arith.constant 0 : index
    %c0_20 = arith.constant 0 : index
    %c0_21 = arith.constant 0 : index
    %21 = vector.load %arg10[%c0_19, %c0_20, %c0_21] : memref<1x1x32xf32, #tpu.memory_space<vmem>>, vector<1x1x32xf32>
    %22 = vector.shape_cast %21 : vector<1x1x32xf32> to vector<1x32xf32>
    %23 = vector.broadcast %22 : vector<1x32xf32> to vector<8x32xf32>
    %24 = arith.addf %20, %23 : vector<8x32xf32>
    %25 = vector.shape_cast %10 : vector<8x32xf32> to vector<1x8x32xf32>
    %26 = vector.shape_cast %17 : vector<8x32xf32> to vector<1x8x32xf32>
    %27 = vector.shape_cast %24 : vector<8x32xf32> to vector<1x8x32xf32>
    %28 = vector.extract_strided_slice %25 {offsets = [0, 0, 0], sizes = [1, 8, 8], strides = [1, 1, 1]} : vector<1x8x32xf32> to vector<1x8x8xf32>
    %29 = vector.extract_strided_slice %26 {offsets = [0, 0, 0], sizes = [1, 8, 8], strides = [1, 1, 1]} : vector<1x8x32xf32> to vector<1x8x8xf32>
    %30 = vector.extract_strided_slice %27 {offsets = [0, 0, 0], sizes = [1, 8, 8], strides = [1, 1, 1]} : vector<1x8x32xf32> to vector<1x8x8xf32>
    "tpu.trace_start"() <{level = 10 : i32, message = "bqd,bkd->bqk"}> : () -> ()
    %cst_22 = arith.constant dense<0.000000e+00> : vector<1x8x8xf32>
    %31 = tpu.matmul %28, %29, %cst_22 {dimension_numbers = #tpu.dot_dimension_numbers<[2], [2], [1], [1], [0, 0, 0, 1, 1, 1], [0], [0]>} : vector<1x8x8xf32>, vector<1x8x8xf32>, vector<1x8x8xf32> -> vector<1x8x8xf32>
    "tpu.trace_stop"() : () -> ()
    %cst_23 = arith.constant dense<0xFF800000> : vector<1x8xf32>
    %32 = vector.multi_reduction <maximumf>, %31, %cst_23 [2] : vector<1x8x8xf32> to vector<1x8xf32>
    %33 = vector.shape_cast %32 : vector<1x8xf32> to vector<1x8x1xf32>
    %34 = vector.broadcast %33 : vector<1x8x1xf32> to vector<1x8x8xf32>
    %35 = arith.subf %31, %34 : vector<1x8x8xf32>
    %36 = math.exp %35 : vector<1x8x8xf32>
    %cst_24 = arith.constant dense<0.000000e+00> : vector<1x8xf32>
    %37 = vector.multi_reduction <add>, %36, %cst_24 [2] : vector<1x8x8xf32> to vector<1x8xf32>
    %38 = vector.shape_cast %37 : vector<1x8xf32> to vector<1x8x1xf32>
    %39 = tpu.reciprocal %38 : vector<1x8x1xf32> -> vector<1x8x1xf32>
    %40 = vector.broadcast %39 : vector<1x8x1xf32> to vector<1x8x8xf32>
    %41 = arith.mulf %36, %40 : vector<1x8x8xf32>
    "tpu.trace_start"() <{level = 10 : i32, message = "bqk,bkd->bqd"}> : () -> ()
    %cst_25 = arith.constant dense<0.000000e+00> : vector<1x8x8xf32>
    %42 = tpu.matmul %41, %30, %cst_25 {dimension_numbers = #tpu.dot_dimension_numbers<[2], [1], [1], [2], [0, 0, 0, 1, 1, 2], [0], [0]>} : vector<1x8x8xf32>, vector<1x8x8xf32>, vector<1x8x8xf32> -> vector<1x8x8xf32>
    "tpu.trace_stop"() : () -> ()
    %43 = vector.extract_strided_slice %25 {offsets = [0, 0, 8], sizes = [1, 8, 8], strides = [1, 1, 1]} : vector<1x8x32xf32> to vector<1x8x8xf32>
    %44 = vector.extract_strided_slice %26 {offsets = [0, 0, 8], sizes = [1, 8, 8], strides = [1, 1, 1]} : vector<1x8x32xf32> to vector<1x8x8xf32>
    %45 = vector.extract_strided_slice %27 {offsets = [0, 0, 8], sizes = [1, 8, 8], strides = [1, 1, 1]} : vector<1x8x32xf32> to vector<1x8x8xf32>
    "tpu.trace_start"() <{level = 10 : i32, message = "bqd,bkd->bqk"}> : () -> ()
    %cst_26 = arith.constant dense<0.000000e+00> : vector<1x8x8xf32>
    %46 = tpu.matmul %43, %44, %cst_26 {dimension_numbers = #tpu.dot_dimension_numbers<[2], [2], [1], [1], [0, 0, 0, 1, 1, 1], [0], [0]>} : vector<1x8x8xf32>, vector<1x8x8xf32>, vector<1x8x8xf32> -> vector<1x8x8xf32>
    "tpu.trace_stop"() : () -> ()
    %cst_27 = arith.constant dense<0xFF800000> : vector<1x8xf32>
    %47 = vector.multi_reduction <maximumf>, %46, %cst_27 [2] : vector<1x8x8xf32> to vector<1x8xf32>
    %48 = vector.shape_cast %47 : vector<1x8xf32> to vector<1x8x1xf32>
    %49 = vector.broadcast %48 : vector<1x8x1xf32> to vector<1x8x8xf32>
    %50 = arith.subf %46, %49 : vector<1x8x8xf32>
    %51 = math.exp %50 : vector<1x8x8xf32>
    %cst_28 = arith.constant dense<0.000000e+00> : vector<1x8xf32>
    %52 = vector.multi_reduction <add>, %51, %cst_28 [2] : vector<1x8x8xf32> to vector<1x8xf32>
    %53 = vector.shape_cast %52 : vector<1x8xf32> to vector<1x8x1xf32>
    %54 = tpu.reciprocal %53 : vector<1x8x1xf32> -> vector<1x8x1xf32>
    %55 = vector.broadcast %54 : vector<1x8x1xf32> to vector<1x8x8xf32>
    %56 = arith.mulf %51, %55 : vector<1x8x8xf32>
    "tpu.trace_start"() <{level = 10 : i32, message = "bqk,bkd->bqd"}> : () -> ()
    %cst_29 = arith.constant dense<0.000000e+00> : vector<1x8x8xf32>
    %57 = tpu.matmul %56, %45, %cst_29 {dimension_numbers = #tpu.dot_dimension_numbers<[2], [1], [1], [2], [0, 0, 0, 1, 1, 2], [0], [0]>} : vector<1x8x8xf32>, vector<1x8x8xf32>, vector<1x8x8xf32> -> vector<1x8x8xf32>
    "tpu.trace_stop"() : () -> ()
    %58 = vector.extract_strided_slice %25 {offsets = [0, 0, 16], sizes = [1, 8, 8], strides = [1, 1, 1]} : vector<1x8x32xf32> to vector<1x8x8xf32>
    %59 = vector.extract_strided_slice %26 {offsets = [0, 0, 16], sizes = [1, 8, 8], strides = [1, 1, 1]} : vector<1x8x32xf32> to vector<1x8x8xf32>
    %60 = vector.extract_strided_slice %27 {offsets = [0, 0, 16], sizes = [1, 8, 8], strides = [1, 1, 1]} : vector<1x8x32xf32> to vector<1x8x8xf32>
    "tpu.trace_start"() <{level = 10 : i32, message = "bqd,bkd->bqk"}> : () -> ()
    %cst_30 = arith.constant dense<0.000000e+00> : vector<1x8x8xf32>
    %61 = tpu.matmul %58, %59, %cst_30 {dimension_numbers = #tpu.dot_dimension_numbers<[2], [2], [1], [1], [0, 0, 0, 1, 1, 1], [0], [0]>} : vector<1x8x8xf32>, vector<1x8x8xf32>, vector<1x8x8xf32> -> vector<1x8x8xf32>
    "tpu.trace_stop"() : () -> ()
    %cst_31 = arith.constant dense<0xFF800000> : vector<1x8xf32>
    %62 = vector.multi_reduction <maximumf>, %61, %cst_31 [2] : vector<1x8x8xf32> to vector<1x8xf32>
    %63 = vector.shape_cast %62 : vector<1x8xf32> to vector<1x8x1xf32>
    %64 = vector.broadcast %63 : vector<1x8x1xf32> to vector<1x8x8xf32>
    %65 = arith.subf %61, %64 : vector<1x8x8xf32>
    %66 = math.exp %65 : vector<1x8x8xf32>
    %cst_32 = arith.constant dense<0.000000e+00> : vector<1x8xf32>
    %67 = vector.multi_reduction <add>, %66, %cst_32 [2] : vector<1x8x8xf32> to vector<1x8xf32>
    %68 = vector.shape_cast %67 : vector<1x8xf32> to vector<1x8x1xf32>
    %69 = tpu.reciprocal %68 : vector<1x8x1xf32> -> vector<1x8x1xf32>
    %70 = vector.broadcast %69 : vector<1x8x1xf32> to vector<1x8x8xf32>
    %71 = arith.mulf %66, %70 : vector<1x8x8xf32>
    "tpu.trace_start"() <{level = 10 : i32, message = "bqk,bkd->bqd"}> : () -> ()
    %cst_33 = arith.constant dense<0.000000e+00> : vector<1x8x8xf32>
    %72 = tpu.matmul %71, %60, %cst_33 {dimension_numbers = #tpu.dot_dimension_numbers<[2], [1], [1], [2], [0, 0, 0, 1, 1, 2], [0], [0]>} : vector<1x8x8xf32>, vector<1x8x8xf32>, vector<1x8x8xf32> -> vector<1x8x8xf32>
    "tpu.trace_stop"() : () -> ()
    %73 = vector.extract_strided_slice %25 {offsets = [0, 0, 24], sizes = [1, 8, 8], strides = [1, 1, 1]} : vector<1x8x32xf32> to vector<1x8x8xf32>
    %74 = vector.extract_strided_slice %26 {offsets = [0, 0, 24], sizes = [1, 8, 8], strides = [1, 1, 1]} : vector<1x8x32xf32> to vector<1x8x8xf32>
    %75 = vector.extract_strided_slice %27 {offsets = [0, 0, 24], sizes = [1, 8, 8], strides = [1, 1, 1]} : vector<1x8x32xf32> to vector<1x8x8xf32>
    "tpu.trace_start"() <{level = 10 : i32, message = "bqd,bkd->bqk"}> : () -> ()
    %cst_34 = arith.constant dense<0.000000e+00> : vector<1x8x8xf32>
    %76 = tpu.matmul %73, %74, %cst_34 {dimension_numbers = #tpu.dot_dimension_numbers<[2], [2], [1], [1], [0, 0, 0, 1, 1, 1], [0], [0]>} : vector<1x8x8xf32>, vector<1x8x8xf32>, vector<1x8x8xf32> -> vector<1x8x8xf32>
    "tpu.trace_stop"() : () -> ()
    %cst_35 = arith.constant dense<0xFF800000> : vector<1x8xf32>
    %77 = vector.multi_reduction <maximumf>, %76, %cst_35 [2] : vector<1x8x8xf32> to vector<1x8xf32>
    %78 = vector.shape_cast %77 : vector<1x8xf32> to vector<1x8x1xf32>
    %79 = vector.broadcast %78 : vector<1x8x1xf32> to vector<1x8x8xf32>
    %80 = arith.subf %76, %79 : vector<1x8x8xf32>
    %81 = math.exp %80 : vector<1x8x8xf32>
    %cst_36 = arith.constant dense<0.000000e+00> : vector<1x8xf32>
    %82 = vector.multi_reduction <add>, %81, %cst_36 [2] : vector<1x8x8xf32> to vector<1x8xf32>
    %83 = vector.shape_cast %82 : vector<1x8xf32> to vector<1x8x1xf32>
    %84 = tpu.reciprocal %83 : vector<1x8x1xf32> -> vector<1x8x1xf32>
    %85 = vector.broadcast %84 : vector<1x8x1xf32> to vector<1x8x8xf32>
    %86 = arith.mulf %81, %85 : vector<1x8x8xf32>
    "tpu.trace_start"() <{level = 10 : i32, message = "bqk,bkd->bqd"}> : () -> ()
    %cst_37 = arith.constant dense<0.000000e+00> : vector<1x8x8xf32>
    %87 = tpu.matmul %86, %75, %cst_37 {dimension_numbers = #tpu.dot_dimension_numbers<[2], [1], [1], [2], [0, 0, 0, 1, 1, 2], [0], [0]>} : vector<1x8x8xf32>, vector<1x8x8xf32>, vector<1x8x8xf32> -> vector<1x8x8xf32>
    "tpu.trace_stop"() : () -> ()
    %88 = tpu.concatenate %42, %57, %72, %87 in 2 : vector<1x8x8xf32>, vector<1x8x8xf32>, vector<1x8x8xf32>, vector<1x8x8xf32> -> vector<1x8x32xf32>
    %89 = vector.shape_cast %88 : vector<1x8x32xf32> to vector<8x32xf32>
    %c0_38 = arith.constant 0 : index
    %c0_39 = arith.constant 0 : index
    %c0_40 = arith.constant 0 : index
    %90 = vector.load %arg11[%c0_38, %c0_39, %c0_40] : memref<1x32x32xf32, #tpu.memory_space<vmem>>, vector<1x32x32xf32>
    %91 = vector.shape_cast %90 : vector<1x32x32xf32> to vector<32x32xf32>
    %cst_41 = arith.constant dense<0.000000e+00> : vector<8x32xf32>
    %92 = tpu.matmul %89, %91, %cst_41 {dimension_numbers = #tpu.dot_dimension_numbers<[1], [0], [0], [1], [0, 0, 1, 1], [], []>} : vector<8x32xf32>, vector<32x32xf32>, vector<8x32xf32> -> vector<8x32xf32>
    %c0_42 = arith.constant 0 : index
    %c0_43 = arith.constant 0 : index
    %c0_44 = arith.constant 0 : index
    %93 = vector.load %arg12[%c0_42, %c0_43, %c0_44] : memref<1x1x32xf32, #tpu.memory_space<vmem>>, vector<1x1x32xf32>
    %94 = vector.shape_cast %93 : vector<1x1x32xf32> to vector<1x32xf32>
    %95 = vector.broadcast %94 : vector<1x32xf32> to vector<8x32xf32>
    %96 = arith.addf %92, %95 : vector<8x32xf32>
    %97 = arith.addf %3, %96 : vector<8x32xf32>
    %c0_45 = arith.constant 0 : index
    %c0_46 = arith.constant 0 : index
    %c0_47 = arith.constant 0 : index
    %98 = vector.load %arg13[%c0_45, %c0_46, %c0_47] : memref<1x1x32xf32, #tpu.memory_space<vmem>>, vector<1x1x32xf32>
    %99 = vector.shape_cast %98 : vector<1x1x32xf32> to vector<1x32xf32>
    %c0_48 = arith.constant 0 : index
    %c0_49 = arith.constant 0 : index
    %c0_50 = arith.constant 0 : index
    %100 = vector.load %arg14[%c0_48, %c0_49, %c0_50] : memref<1x1x32xf32, #tpu.memory_space<vmem>>, vector<1x1x32xf32>
    %101 = vector.shape_cast %100 : vector<1x1x32xf32> to vector<1x32xf32>
    %cst_51 = arith.constant dense<0.000000e+00> : vector<8xf32>
    %102 = vector.multi_reduction <add>, %97, %cst_51 [1] : vector<8x32xf32> to vector<8xf32>
    %103 = vector.shape_cast %102 : vector<8xf32> to vector<8x1xf32>
    %cst_52 = arith.constant 3.200000e+01 : f32
    %104 = vector.broadcast %cst_52 : f32 to vector<8x1xf32>
    %105 = arith.divf %103, %104 : vector<8x1xf32>
    %106 = vector.broadcast %105 : vector<8x1xf32> to vector<8x32xf32>
    %107 = arith.subf %97, %106 : vector<8x32xf32>
    %108 = arith.mulf %107, %107 : vector<8x32xf32>
    %cst_53 = arith.constant dense<0.000000e+00> : vector<8xf32>
    %109 = vector.multi_reduction <add>, %108, %cst_53 [1] : vector<8x32xf32> to vector<8xf32>
    %110 = vector.shape_cast %109 : vector<8xf32> to vector<8x1xf32>
    %cst_54 = arith.constant 3.200000e+01 : f32
    %111 = vector.broadcast %cst_54 : f32 to vector<8x1xf32>
    %112 = arith.divf %110, %111 : vector<8x1xf32>
    %cst_55 = arith.constant 9.99999974E-6 : f32
    %113 = vector.broadcast %cst_55 : f32 to vector<8x1xf32>
    %114 = arith.addf %112, %113 : vector<8x1xf32>
    %115 = math.rsqrt %114 : vector<8x1xf32>
    %116 = vector.broadcast %115 : vector<8x1xf32> to vector<8x32xf32>
    %117 = arith.mulf %107, %116 : vector<8x32xf32>
    %118 = vector.broadcast %99 : vector<1x32xf32> to vector<8x32xf32>
    %119 = arith.mulf %117, %118 : vector<8x32xf32>
    %120 = vector.broadcast %101 : vector<1x32xf32> to vector<8x32xf32>
    %121 = arith.addf %119, %120 : vector<8x32xf32>
    %c0_56 = arith.constant 0 : index
    %c0_57 = arith.constant 0 : index
    %c0_58 = arith.constant 0 : index
    %122 = vector.load %arg15[%c0_56, %c0_57, %c0_58] : memref<1x32x64xf32, #tpu.memory_space<vmem>>, vector<1x32x64xf32>
    %123 = vector.shape_cast %122 : vector<1x32x64xf32> to vector<32x64xf32>
    %cst_59 = arith.constant dense<0.000000e+00> : vector<8x64xf32>
    %124 = tpu.matmul %121, %123, %cst_59 {dimension_numbers = #tpu.dot_dimension_numbers<[1], [0], [0], [1], [0, 0, 1, 1], [], []>} : vector<8x32xf32>, vector<32x64xf32>, vector<8x64xf32> -> vector<8x64xf32>
    %c0_60 = arith.constant 0 : index
    %c0_61 = arith.constant 0 : index
    %c0_62 = arith.constant 0 : index
    %125 = vector.load %arg16[%c0_60, %c0_61, %c0_62] : memref<1x1x64xf32, #tpu.memory_space<vmem>>, vector<1x1x64xf32>
    %126 = vector.shape_cast %125 : vector<1x1x64xf32> to vector<1x64xf32>
    %127 = vector.broadcast %126 : vector<1x64xf32> to vector<8x64xf32>
    %128 = arith.addf %124, %127 : vector<8x64xf32>
    %cst_63 = arith.constant 0.000000e+00 : f32
    %129 = vector.broadcast %cst_63 : f32 to vector<8x64xf32>
    %130 = arith.maximumf %128, %129 : vector<8x64xf32>
    %c0_64 = arith.constant 0 : index
    %c0_65 = arith.constant 0 : index
    %c0_66 = arith.constant 0 : index
    %131 = vector.load %arg17[%c0_64, %c0_65, %c0_66] : memref<1x64x32xf32, #tpu.memory_space<vmem>>, vector<1x64x32xf32>
    %132 = vector.shape_cast %131 : vector<1x64x32xf32> to vector<64x32xf32>
    %cst_67 = arith.constant dense<0.000000e+00> : vector<8x32xf32>
    %133 = tpu.matmul %130, %132, %cst_67 {dimension_numbers = #tpu.dot_dimension_numbers<[1], [0], [0], [1], [0, 0, 1, 1], [], []>} : vector<8x64xf32>, vector<64x32xf32>, vector<8x32xf32> -> vector<8x32xf32>
    %c0_68 = arith.constant 0 : index
    %c0_69 = arith.constant 0 : index
    %c0_70 = arith.constant 0 : index
    %134 = vector.load %arg18[%c0_68, %c0_69, %c0_70] : memref<1x1x32xf32, #tpu.memory_space<vmem>>, vector<1x1x32xf32>
    %135 = vector.shape_cast %134 : vector<1x1x32xf32> to vector<1x32xf32>
    %136 = vector.broadcast %135 : vector<1x32xf32> to vector<8x32xf32>
    %137 = arith.addf %133, %136 : vector<8x32xf32>
    %138 = arith.addf %121, %137 : vector<8x32xf32>
    %c0_71 = arith.constant 0 : index
    %c0_72 = arith.constant 0 : index
    %c0_73 = arith.constant 0 : index
    %139 = vector.load %arg19[%c0_71, %c0_72, %c0_73] : memref<1x1x32xf32, #tpu.memory_space<vmem>>, vector<1x1x32xf32>
    %140 = vector.shape_cast %139 : vector<1x1x32xf32> to vector<1x32xf32>
    %c0_74 = arith.constant 0 : index
    %c0_75 = arith.constant 0 : index
    %c0_76 = arith.constant 0 : index
    %141 = vector.load %arg20[%c0_74, %c0_75, %c0_76] : memref<1x1x32xf32, #tpu.memory_space<vmem>>, vector<1x1x32xf32>
    %142 = vector.shape_cast %141 : vector<1x1x32xf32> to vector<1x32xf32>
    %cst_77 = arith.constant dense<0.000000e+00> : vector<8xf32>
    %143 = vector.multi_reduction <add>, %138, %cst_77 [1] : vector<8x32xf32> to vector<8xf32>
    %144 = vector.shape_cast %143 : vector<8xf32> to vector<8x1xf32>
    %cst_78 = arith.constant 3.200000e+01 : f32
    %145 = vector.broadcast %cst_78 : f32 to vector<8x1xf32>
    %146 = arith.divf %144, %145 : vector<8x1xf32>
    %147 = vector.broadcast %146 : vector<8x1xf32> to vector<8x32xf32>
    %148 = arith.subf %138, %147 : vector<8x32xf32>
    %149 = arith.mulf %148, %148 : vector<8x32xf32>
    %cst_79 = arith.constant dense<0.000000e+00> : vector<8xf32>
    %150 = vector.multi_reduction <add>, %149, %cst_79 [1] : vector<8x32xf32> to vector<8xf32>
    %151 = vector.shape_cast %150 : vector<8xf32> to vector<8x1xf32>
    %cst_80 = arith.constant 3.200000e+01 : f32
    %152 = vector.broadcast %cst_80 : f32 to vector<8x1xf32>
    %153 = arith.divf %151, %152 : vector<8x1xf32>
    %cst_81 = arith.constant 9.99999974E-6 : f32
    %154 = vector.broadcast %cst_81 : f32 to vector<8x1xf32>
    %155 = arith.addf %153, %154 : vector<8x1xf32>
    %156 = math.rsqrt %155 : vector<8x1xf32>
    %157 = vector.broadcast %156 : vector<8x1xf32> to vector<8x32xf32>
    %158 = arith.mulf %148, %157 : vector<8x32xf32>
    %159 = vector.broadcast %140 : vector<1x32xf32> to vector<8x32xf32>
    %160 = arith.mulf %158, %159 : vector<8x32xf32>
    %161 = vector.broadcast %142 : vector<1x32xf32> to vector<8x32xf32>
    %162 = arith.addf %160, %161 : vector<8x32xf32>
    %c0_82 = arith.constant 0 : index
    %c0_83 = arith.constant 0 : index
    %163 = vector.load %arg24[%c0_82, %c0_83] : memref<8x32xf32, #tpu.memory_space<vmem>>, vector<8x32xf32>
    tpu.vector_store %arg24[%c0_82, %c0_83], %162 {strides = array<i32>} : memref<8x32xf32, #tpu.memory_space<vmem>>, vector<8x32xf32>,
    %c1_i32 = arith.constant 1 : i32
    %164 = arith.cmpi eq, %arg1, %c1_i32 : i32
    %165 = arith.extui %164 : i1 to i32
    %c0_i32_84 = arith.constant 0 : i32
    %166 = arith.cmpi ne, %165, %c0_i32_84 : i32
    scf.if %166 {
      %c0_85 = arith.constant 0 : index
      %c0_86 = arith.constant 0 : index
      %167 = vector.load %arg21[%c0_85, %c0_86] : memref<32x4xf32, #tpu.memory_space<vmem>>, vector<32x4xf32>
      %cst_87 = arith.constant dense<0.000000e+00> : vector<8x4xf32>
      %168 = tpu.matmul %162, %167, %cst_87 {dimension_numbers = #tpu.dot_dimension_numbers<[1], [0], [0], [1], [0, 0, 1, 1], [], []>} : vector<8x32xf32>, vector<32x4xf32>, vector<8x4xf32> -> vector<8x4xf32>
      %c0_88 = arith.constant 0 : index
      %c0_89 = arith.constant 0 : index
      %169 = vector.load %arg22[%c0_88, %c0_89] : memref<1x4xf32, #tpu.memory_space<vmem>>, vector<1x4xf32>
      %170 = vector.broadcast %169 : vector<1x4xf32> to vector<8x4xf32>
      %171 = arith.addf %168, %170 : vector<8x4xf32>
      %c0_90 = arith.constant 0 : index
      %c0_91 = arith.constant 0 : index
      %172 = vector.load %arg23[%c0_90, %c0_91] : memref<8x4xf32, #tpu.memory_space<vmem>>, vector<8x4xf32>
      tpu.vector_store %arg23[%c0_90, %c0_91], %171 {strides = array<i32>} : memref<8x4xf32, #tpu.memory_space<vmem>>, vector<8x4xf32>,
    } else {
    }
    return
  }
  func.func @transform_0(%arg0: i32, %arg1: i32) -> (i32, i32) {
    %c0_i32 = arith.constant 0 : i32
    %c0_i32_0 = arith.constant 0 : i32
    return %arg0, %c0_i32 : i32, i32
  }
  func.func @transform_1(%arg0: i32, %arg1: i32) -> (i32, i32) {
    %c0_i32 = arith.constant 0 : i32
    %c0_i32_0 = arith.constant 0 : i32
    %c0_i32_1 = arith.constant 0 : i32
    return %c0_i32, %c0_i32_0 : i32, i32
  }
  func.func @transform_2(%arg0: i32, %arg1: i32) -> (i32, i32) {
    %c0_i32 = arith.constant 0 : i32
    %c0_i32_0 = arith.constant 0 : i32
    %c0_i32_1 = arith.constant 0 : i32
    return %c0_i32, %c0_i32_0 : i32, i32
  }
  func.func @transform_3(%arg0: i32, %arg1: i32) -> (i32, i32, i32) {
    %c0_i32 = arith.constant 0 : i32
    %c0_i32_0 = arith.constant 0 : i32
    %c0_i32_1 = arith.constant 0 : i32
    return %arg1, %c0_i32, %c0_i32_0 : i32, i32, i32
  }
  func.func @transform_4(%arg0: i32, %arg1: i32) -> (i32, i32, i32) {
    %c0_i32 = arith.constant 0 : i32
    %c0_i32_0 = arith.constant 0 : i32
    %c0_i32_1 = arith.constant 0 : i32
    return %arg1, %c0_i32, %c0_i32_0 : i32, i32, i32
  }
  func.func @transform_5(%arg0: i32, %arg1: i32) -> (i32, i32, i32) {
    %c0_i32 = arith.constant 0 : i32
    %c0_i32_0 = arith.constant 0 : i32
    %c0_i32_1 = arith.constant 0 : i32
    return %arg1, %c0_i32, %c0_i32_0 : i32, i32, i32
  }
  func.func @transform_6(%arg0: i32, %arg1: i32) -> (i32, i32, i32) {
    %c0_i32 = arith.constant 0 : i32
    %c0_i32_0 = arith.constant 0 : i32
    %c0_i32_1 = arith.constant 0 : i32
    return %arg1, %c0_i32, %c0_i32_0 : i32, i32, i32
  }
  func.func @transform_7(%arg0: i32, %arg1: i32) -> (i32, i32, i32) {
    %c0_i32 = arith.constant 0 : i32
    %c0_i32_0 = arith.constant 0 : i32
    %c0_i32_1 = arith.constant 0 : i32
    return %arg1, %c0_i32, %c0_i32_0 : i32, i32, i32
  }
  func.func @transform_8(%arg0: i32, %arg1: i32) -> (i32, i32, i32) {
    %c0_i32 = arith.constant 0 : i32
    %c0_i32_0 = arith.constant 0 : i32
    %c0_i32_1 = arith.constant 0 : i32
    return %arg1, %c0_i32, %c0_i32_0 : i32, i32, i32
  }
  func.func @transform_9(%arg0: i32, %arg1: i32) -> (i32, i32, i32) {
    %c0_i32 = arith.constant 0 : i32
    %c0_i32_0 = arith.constant 0 : i32
    %c0_i32_1 = arith.constant 0 : i32
    return %arg1, %c0_i32, %c0_i32_0 : i32, i32, i32
  }
  func.func @transform_10(%arg0: i32, %arg1: i32) -> (i32, i32, i32) {
    %c0_i32 = arith.constant 0 : i32
    %c0_i32_0 = arith.constant 0 : i32
    %c0_i32_1 = arith.constant 0 : i32
    return %arg1, %c0_i32, %c0_i32_0 : i32, i32, i32
  }
  func.func @transform_11(%arg0: i32, %arg1: i32) -> (i32, i32, i32) {
    %c0_i32 = arith.constant 0 : i32
    %c0_i32_0 = arith.constant 0 : i32
    %c0_i32_1 = arith.constant 0 : i32
    return %arg1, %c0_i32, %c0_i32_0 : i32, i32, i32
  }
  func.func @transform_12(%arg0: i32, %arg1: i32) -> (i32, i32, i32) {
    %c0_i32 = arith.constant 0 : i32
    %c0_i32_0 = arith.constant 0 : i32
    %c0_i32_1 = arith.constant 0 : i32
    return %arg1, %c0_i32, %c0_i32_0 : i32, i32, i32
  }
  func.func @transform_13(%arg0: i32, %arg1: i32) -> (i32, i32, i32) {
    %c0_i32 = arith.constant 0 : i32
    %c0_i32_0 = arith.constant 0 : i32
    %c0_i32_1 = arith.constant 0 : i32
    return %arg1, %c0_i32, %c0_i32_0 : i32, i32, i32
  }
  func.func @transform_14(%arg0: i32, %arg1: i32) -> (i32, i32, i32) {
    %c0_i32 = arith.constant 0 : i32
    %c0_i32_0 = arith.constant 0 : i32
    %c0_i32_1 = arith.constant 0 : i32
    return %arg1, %c0_i32, %c0_i32_0 : i32, i32, i32
  }
  func.func @transform_15(%arg0: i32, %arg1: i32) -> (i32, i32, i32) {
    %c0_i32 = arith.constant 0 : i32
    %c0_i32_0 = arith.constant 0 : i32
    %c0_i32_1 = arith.constant 0 : i32
    return %arg1, %c0_i32, %c0_i32_0 : i32, i32, i32
  }
  func.func @transform_16(%arg0: i32, %arg1: i32) -> (i32, i32, i32) {
    %c0_i32 = arith.constant 0 : i32
    %c0_i32_0 = arith.constant 0 : i32
    %c0_i32_1 = arith.constant 0 : i32
    return %arg1, %c0_i32, %c0_i32_0 : i32, i32, i32
  }
  func.func @transform_17(%arg0: i32, %arg1: i32) -> (i32, i32, i32) {
    %c0_i32 = arith.constant 0 : i32
    %c0_i32_0 = arith.constant 0 : i32
    %c0_i32_1 = arith.constant 0 : i32
    return %arg1, %c0_i32, %c0_i32_0 : i32, i32, i32
  }
  func.func @transform_18(%arg0: i32, %arg1: i32) -> (i32, i32, i32) {
    %c0_i32 = arith.constant 0 : i32
    %c0_i32_0 = arith.constant 0 : i32
    %c0_i32_1 = arith.constant 0 : i32
    return %arg1, %c0_i32, %c0_i32_0 : i32, i32, i32
  }
  func.func @transform_19(%arg0: i32, %arg1: i32) -> (i32, i32) {
    %c0_i32 = arith.constant 0 : i32
    %c0_i32_0 = arith.constant 0 : i32
    %c0_i32_1 = arith.constant 0 : i32
    return %c0_i32, %c0_i32_0 : i32, i32
  }
  func.func @transform_20(%arg0: i32, %arg1: i32) -> (i32, i32) {
    %c0_i32 = arith.constant 0 : i32
    %c0_i32_0 = arith.constant 0 : i32
    %c0_i32_1 = arith.constant 0 : i32
    return %c0_i32, %c0_i32_0 : i32, i32
  }
  func.func @transform_21(%arg0: i32, %arg1: i32) -> (i32, i32) {
    %c0_i32 = arith.constant 0 : i32
    %c0_i32_0 = arith.constant 0 : i32
    return %arg0, %c0_i32 : i32, i32
  }
}

</mosaic_0001>

<llo_original>
// kernel: tpu_custom_call.1
$region0: #{tpu_custom_call.1}
  #allocation0 [shape = 'u32[]', space=smem, size = 0x4, offset = 0x4, fixed_abs, tag = 'smem constant byte address 0x4 - core index']
  #allocation1 [shape = 'u32[144,128]{1,0:T(1,128)}', space=vmem, size = 0x12000, scoped, tag = 'internal scratch']
  #allocation2 [shape = 'f32[8,32]{1,0:T(8,128)}', space=vmem, size = 0x1000, scoped, tag = 'scratch operand']
  %s0 = inlined_call_operand.vmem [shape: f32[16,4], index: 0, kind: input, shape index: {}]
  %s1 = inlined_call_operand.vmem [shape: f32[4,32], index: 1, kind: input, shape index: {}]
  %s2 = inlined_call_operand.vmem [shape: f32[1,32], index: 2, kind: input, shape index: {}]
  %s3 = inlined_call_operand.vmem [shape: f32[2,32,32], index: 3, kind: input, shape index: {}]
  %s4 = inlined_call_operand.vmem [shape: f32[2,1,32], index: 4, kind: input, shape index: {}]
  %s5 = inlined_call_operand.vmem [shape: f32[2,32,32], index: 5, kind: input, shape index: {}]
  %s6 = inlined_call_operand.vmem [shape: f32[2,1,32], index: 6, kind: input, shape index: {}]
  %s7 = inlined_call_operand.vmem [shape: f32[2,32,32], index: 7, kind: input, shape index: {}]
  %s8 = inlined_call_operand.vmem [shape: f32[2,1,32], index: 8, kind: input, shape index: {}]
  %s9 = inlined_call_operand.hbm [shape: f32[2,32,32], index: 9, kind: input, shape index: {}]
  %s10 = inlined_call_operand.vmem [shape: f32[2,1,32], index: 10, kind: input, shape index: {}]
  %s11 = inlined_call_operand.vmem [shape: f32[2,1,32], index: 11, kind: input, shape index: {}]
  %s12 = inlined_call_operand.vmem [shape: f32[2,1,32], index: 12, kind: input, shape index: {}]
  %s13 = inlined_call_operand.hbm [shape: f32[2,32,64], index: 13, kind: input, shape index: {}]
  %s14 = inlined_call_operand.vmem [shape: f32[2,1,64], index: 14, kind: input, shape index: {}]
  %s15 = inlined_call_operand.vmem [shape: f32[2,64,32], index: 15, kind: input, shape index: {}]
  %s16 = inlined_call_operand.vmem [shape: f32[2,1,32], index: 16, kind: input, shape index: {}]
  %s17 = inlined_call_operand.vmem [shape: f32[2,1,32], index: 17, kind: input, shape index: {}]
  %s18 = inlined_call_operand.vmem [shape: f32[2,1,32], index: 18, kind: input, shape index: {}]
  %s19 = inlined_call_operand.vmem [shape: f32[32,4], index: 19, kind: input, shape index: {}]
  %s20 = inlined_call_operand.vmem [shape: f32[1,4], index: 20, kind: input, shape index: {}]
  %s21 = inlined_call_operand.vmem [shape: f32[16,4], index: 21, kind: output, shape index: {}]
  %s22 = sld [smem:[#allocation0]]
  $region133: #{tpu_custom_call.1} parent=0
    _
  %s24 = ssub.s32 1, %s22
  %s25 = scalar_select 0, %s24, %s22
  $region1: #{tpu_custom_call.1} parent=0
    #allocation3 [shape = 'u8[32768]{0}', space=vmem, size = 0x8000, scoped, tag = 'input window, operand 9']
    #allocation4 [shape = 's32[2]{0}', space=sflag, size = 0x8, scoped, tag = 'scoped memory for tpu_custom_call.1']
    #allocation5 [shape = 'u8[32768]{0}', space=vmem, size = 0x8000, scoped, tag = 'input window, operand 13']
    #allocation6 [shape = 's32[2]{0}', space=sflag, size = 0x8, scoped, tag = 'scoped memory for tpu_custom_call.1']
    %26 = vsyncpa [#allocation4], 0
    %s27 = scalar_lea.sflag [#allocation4], 1
    %28 = vsyncpa %s27, 0
    %29 = vsyncpa [#allocation6], 0
    %s30 = scalar_lea.sflag [#allocation6], 1
    %31 = vsyncpa %s30, 0
    loop: start=0, step=1, limit=6
    $region2: #{tpu_custom_call.1} parent=1 // loop_pre_header
      _
    $region3: #{tpu_custom_call.1} parent=1 // loop_header
      %s33 = sphi 0, %s37
      %p34 = scmp.ge.s32.totalorder %s33, 6
      %s40 = sphi 0, %s52
      %s41 = sphi 0, %s48
      %s42 = sphi 0, %s40
      %s43 = sphi 0, %s41
      %s44 = sphi 0, %s42
      %s45 = sphi 0, %s43
      %s55 = sphi 0, %s57
      %s58 = sphi 0, %s55
      %s59 = sphi 0, %s58
      %s75 = sphi 0, %s59
      %s79 = sphi 0, %s79
      %s81 = sphi 0, %s79
      %s82 = sphi 0, %s81
      %s96 = sphi 0, %s82
      %s100 = sphi 0, %s100
      %s102 = sphi 0, %s100
      %s103 = sphi 0, %s102
      %s117 = sphi 0, %s103
      %s123 = sphi 0, %s125
      %s126 = sphi 0, %s123
      %s127 = sphi 0, %s126
      %s143 = sphi 0, %s127
      %s149 = sphi 0, %s151
      %s152 = sphi 0, %s149
      %s153 = sphi 0, %s152
      %s169 = sphi 0, %s153
      %s175 = sphi 0, %s177
      %s178 = sphi 0, %s175
      %s179 = sphi 0, %s178
      %s195 = sphi 0, %s179
      %s201 = sphi 0, %s203
      %s204 = sphi 0, %s201
      %s205 = sphi 0, %s204
      %s221 = sphi 0, %s205
      %s227 = sphi 0, %s229
      %s230 = sphi 0, %s227
      %s231 = sphi 0, %s230
      %s247 = sphi 0, %s231
      %s253 = sphi 0, %s255
      %s256 = sphi 0, %s253
      %s257 = sphi 0, %s256
      %s273 = sphi 0, %s257
      %s279 = sphi 0, %s281
      %s282 = sphi 0, %s279
      %s283 = sphi 0, %s282
      %s299 = sphi 0, %s283
      %s305 = sphi 0, %s307
      %s308 = sphi 0, %s305
      %s309 = sphi 0, %s308
      %s325 = sphi 0, %s309
      %s331 = sphi 0, %s333
      %s334 = sphi 0, %s331
      %s335 = sphi 0, %s334
      %s351 = sphi 0, %s335
      %s357 = sphi 0, %s359
      %s360 = sphi 0, %s357
      %s361 = sphi 0, %s360
      %s377 = sphi 0, %s361
      %s383 = sphi 0, %s385
      %s386 = sphi 0, %s383
      %s387 = sphi 0, %s386
      %s403 = sphi 0, %s387
      %s409 = sphi 0, %s411
      %s412 = sphi 0, %s409
      %s413 = sphi 0, %s412
      %s429 = sphi 0, %s413
      %s435 = sphi 0, %s437
      %s438 = sphi 0, %s435
      %s439 = sphi 0, %s438
      %s455 = sphi 0, %s439
      %s461 = sphi 0, %s463
      %s464 = sphi 0, %s461
      %s465 = sphi 0, %s464
      %s481 = sphi 0, %s465
      %s487 = sphi 0, %s489
      %s490 = sphi 0, %s487
      %s491 = sphi 0, %s490
      %s507 = sphi 0, %s491
      %s513 = sphi 0, %s515
      %s516 = sphi 0, %s513
      %s517 = sphi 0, %s516
      %s533 = sphi 0, %s517
      %s537 = sphi 0, %s537
      %s539 = sphi 0, %s537
      %s540 = sphi 0, %s539
      %s554 = sphi 0, %s540
      %s558 = sphi 0, %s558
      %s560 = sphi 0, %s558
      %s561 = sphi 0, %s560
      %s575 = sphi 0, %s561
      %s581 = sphi 0, %s583
      %s584 = sphi 0, %s581
      %s585 = sphi 0, %s584
      %s601 = sphi 0, %s585
    $region4: #{tpu_custom_call.1} parent=1 // loop_header_branch
      %36 = sbr.rel (%p34) target = $region8
    $region5: #{tpu_custom_call.1} parent=1 // loop_body
      %s38 = ssub.s32 %s33, 1
      %s39 = ssub.s32 %s33, 2
      %s46 = sadd.s32 1, %s41
      %p47 = scmp.ge.s32.totalorder %s46, 2
      %s48 = scalar_select %p47, 0, %s46
      %s49 = sadd.s32 1, %s40
      %s50 = scalar_select %p47, %s49, %s40
      %p51 = scmp.ge.s32.totalorder %s50, 2
      %s52 = scalar_select %p51, 0, %s50
      %s53 = ssub.s32 %s40, %s52
      %p54 = scmp.eq.s32.totalorder %s53, 0
      %s56 = sadd.s32 %s55, 1
      %s57 = scalar_select %p54, %s55, %s56
      %p60 = pneg %p54
      %p61 = scmp.eq.s32.totalorder %s33, 3
      %p62 = por %p60, %p61
      %p63 = scmp.ne.s32.totalorder %s55, %s58
      %p64 = scmp.eq.s32.totalorder %s33, 0
      %p65 = por %p63, %p64
      %p66 = scmp.ne.s32.totalorder %s55, %s58
      %p67 = scmp.eq.s32.totalorder %s38, 3
      %p68 = por %p66, %p67
      %p69 = scmp.ne.s32.totalorder %s58, %s59
      %p70 = scmp.eq.s32.totalorder %s38, 0
      %p71 = por %p69, %p70
      %p72 = scmp.ne.s32.totalorder %s58, %s59
      %p73 = scmp.eq.s32.totalorder %s39, 3
      %p74 = por %p72, %p73
      %p76 = scmp.ne.s32.totalorder %s59, %s75
      %p77 = scmp.eq.s32.totalorder %s39, 0
      %p78 = por %p76, %p77
      %s80 = sadd.s32 %s79, 1
      %p83 = scmp.eq.s32.totalorder %s33, 3
      %p84 = scmp.ne.s32.totalorder %s79, %s81
      %p85 = scmp.eq.s32.totalorder %s33, 0
      %p86 = por %p84, %p85
      %p87 = scmp.ne.s32.totalorder %s79, %s81
      %p88 = scmp.eq.s32.totalorder %s38, 3
      %p89 = por %p87, %p88
      %p90 = scmp.ne.s32.totalorder %s81, %s82
      %p91 = scmp.eq.s32.totalorder %s38, 0
      %p92 = por %p90, %p91
      %p93 = scmp.ne.s32.totalorder %s81, %s82
      %p94 = scmp.eq.s32.totalorder %s39, 3
      %p95 = por %p93, %p94
      %p97 = scmp.ne.s32.totalorder %s82, %s96
      %p98 = scmp.eq.s32.totalorder %s39, 0
      %p99 = por %p97, %p98
      %s101 = sadd.s32 %s100, 1
      %p104 = scmp.eq.s32.totalorder %s33, 3
      %p105 = scmp.ne.s32.totalorder %s100, %s102
      %p106 = scmp.eq.s32.totalorder %s33, 0
      %p107 = por %p105, %p106
      %p108 = scmp.ne.s32.totalorder %s100, %s102
      %p109 = scmp.eq.s32.totalorder %s38, 3
      %p110 = por %p108, %p109
      %p111 = scmp.ne.s32.totalorder %s102, %s103
      %p112 = scmp.eq.s32.totalorder %s38, 0
      %p113 = por %p111, %p112
      %p114 = scmp.ne.s32.totalorder %s102, %s103
      %p115 = scmp.eq.s32.totalorder %s39, 3
      %p116 = por %p114, %p115
      %p118 = scmp.ne.s32.totalorder %s103, %s117
      %p119 = scmp.eq.s32.totalorder %s39, 0
      %p120 = por %p118, %p119
      %s121 = ssub.s32 %s41, %s48
      %p122 = scmp.eq.s32.totalorder %s121, 0
      %s124 = sadd.s32 %s123, 1
      %s125 = scalar_select %p122, %s123, %s124
      %p128 = pneg %p122
      %p129 = scmp.eq.s32.totalorder %s33, 3
      %p130 = por %p128, %p129
      %p131 = scmp.ne.s32.totalorder %s123, %s126
      %p132 = scmp.eq.s32.totalorder %s33, 0
      %p133 = por %p131, %p132
      %p134 = scmp.ne.s32.totalorder %s123, %s126
      %p135 = scmp.eq.s32.totalorder %s38, 3
      %p136 = por %p134, %p135
      %p137 = scmp.ne.s32.totalorder %s126, %s127
      %p138 = scmp.eq.s32.totalorder %s38, 0
      %p139 = por %p137, %p138
      %p140 = scmp.ne.s32.totalorder %s126, %s127
      %p141 = scmp.eq.s32.totalorder %s39, 3
      %p142 = por %p140, %p141
      %p144 = scmp.ne.s32.totalorder %s127, %s143
      %p145 = scmp.eq.s32.totalorder %s39, 0
      %p146 = por %p144, %p145
      %s147 = ssub.s32 %s41, %s48
      %p148 = scmp.eq.s32.totalorder %s147, 0
      %s150 = sadd.s32 %s149, 1
      %s151 = scalar_select %p148, %s149, %s150
      %p154 = pneg %p148
      %p155 = scmp.eq.s32.totalorder %s33, 3
      %p156 = por %p154, %p155
      %p157 = scmp.ne.s32.totalorder %s149, %s152
      %p158 = scmp.eq.s32.totalorder %s33, 0
      %p159 = por %p157, %p158
      %p160 = scmp.ne.s32.totalorder %s149, %s152
      %p161 = scmp.eq.s32.totalorder %s38, 3
      %p162 = por %p160, %p161
      %p163 = scmp.ne.s32.totalorder %s152, %s153
      %p164 = scmp.eq.s32.totalorder %s38, 0
      %p165 = por %p163, %p164
      %p166 = scmp.ne.s32.totalorder %s152, %s153
      %p167 = scmp.eq.s32.totalorder %s39, 3
      %p168 = por %p166, %p167
      %p170 = scmp.ne.s32.totalorder %s153, %s169
      %p171 = scmp.eq.s32.totalorder %s39, 0
      %p172 = por %p170, %p171
      %s173 = ssub.s32 %s41, %s48
      %p174 = scmp.eq.s32.totalorder %s173, 0
      %s176 = sadd.s32 %s175, 1
      %s177 = scalar_select %p174, %s175, %s176
      %p180 = pneg %p174
      %p181 = scmp.eq.s32.totalorder %s33, 3
      %p182 = por %p180, %p181
      %p183 = scmp.ne.s32.totalorder %s175, %s178
      %p184 = scmp.eq.s32.totalorder %s33, 0
      %p185 = por %p183, %p184
      %p186 = scmp.ne.s32.totalorder %s175, %s178
      %p187 = scmp.eq.s32.totalorder %s38, 3
      %p188 = por %p186, %p187
      %p189 = scmp.ne.s32.totalorder %s178, %s179
      %p190 = scmp.eq.s32.totalorder %s38, 0
      %p191 = por %p189, %p190
      %p192 = scmp.ne.s32.totalorder %s178, %s179
      %p193 = scmp.eq.s32.totalorder %s39, 3
      %p194 = por %p192, %p193
      %p196 = scmp.ne.s32.totalorder %s179, %s195
      %p197 = scmp.eq.s32.totalorder %s39, 0
      %p198 = por %p196, %p197
      %s199 = ssub.s32 %s41, %s48
      %p200 = scmp.eq.s32.totalorder %s199, 0
      %s202 = sadd.s32 %s201, 1
      %s203 = scalar_select %p200, %s201, %s202
      %p206 = pneg %p200
      %p207 = scmp.eq.s32.totalorder %s33, 3
      %p208 = por %p206, %p207
      %p209 = scmp.ne.s32.totalorder %s201, %s204
      %p210 = scmp.eq.s32.totalorder %s33, 0
      %p211 = por %p209, %p210
      %p212 = scmp.ne.s32.totalorder %s201, %s204
      %p213 = scmp.eq.s32.totalorder %s38, 3
      %p214 = por %p212, %p213
      %p215 = scmp.ne.s32.totalorder %s204, %s205
      %p216 = scmp.eq.s32.totalorder %s38, 0
      %p217 = por %p215, %p216
      %p218 = scmp.ne.s32.totalorder %s204, %s205
      %p219 = scmp.eq.s32.totalorder %s39, 3
      %p220 = por %p218, %p219
      %p222 = scmp.ne.s32.totalorder %s205, %s221
      %p223 = scmp.eq.s32.totalorder %s39, 0
      %p224 = por %p222, %p223
      %s225 = ssub.s32 %s41, %s48
      %p226 = scmp.eq.s32.totalorder %s225, 0
      %s228 = sadd.s32 %s227, 1
      %s229 = scalar_select %p226, %s227, %s228
      %p232 = pneg %p226
      %p233 = scmp.eq.s32.totalorder %s33, 3
      %p234 = por %p232, %p233
      %p235 = scmp.ne.s32.totalorder %s227, %s230
      %p236 = scmp.eq.s32.totalorder %s33, 0
      %p237 = por %p235, %p236
      %p238 = scmp.ne.s32.totalorder %s227, %s230
      %p239 = scmp.eq.s32.totalorder %s38, 3
      %p240 = por %p238, %p239
      %p241 = scmp.ne.s32.totalorder %s230, %s231
      %p242 = scmp.eq.s32.totalorder %s38, 0
      %p243 = por %p241, %p242
      %p244 = scmp.ne.s32.totalorder %s230, %s231
      %p245 = scmp.eq.s32.totalorder %s39, 3
      %p246 = por %p244, %p245
      %p248 = scmp.ne.s32.totalorder %s231, %s247
      %p249 = scmp.eq.s32.totalorder %s39, 0
      %p250 = por %p248, %p249
      %s251 = ssub.s32 %s41, %s48
      %p252 = scmp.eq.s32.totalorder %s251, 0
      %s254 = sadd.s32 %s253, 1
      %s255 = scalar_select %p252, %s253, %s254
      %p258 = pneg %p252
      %p259 = scmp.eq.s32.totalorder %s33, 3
      %p260 = por %p258, %p259
      %p261 = scmp.ne.s32.totalorder %s253, %s256
      %p262 = scmp.eq.s32.totalorder %s33, 0
      %p263 = por %p261, %p262
      %p264 = scmp.ne.s32.totalorder %s253, %s256
      %p265 = scmp.eq.s32.totalorder %s38, 3
      %p266 = por %p264, %p265
      %p267 = scmp.ne.s32.totalorder %s256, %s257
      %p268 = scmp.eq.s32.totalorder %s38, 0
      %p269 = por %p267, %p268
      %p270 = scmp.ne.s32.totalorder %s256, %s257
      %p271 = scmp.eq.s32.totalorder %s39, 3
      %p272 = por %p270, %p271
      %p274 = scmp.ne.s32.totalorder %s257, %s273
      %p275 = scmp.eq.s32.totalorder %s39, 0
      %p276 = por %p274, %p275
      %s277 = ssub.s32 %s41, %s48
      %p278 = scmp.eq.s32.totalorder %s277, 0
      %s280 = sadd.s32 %s279, 1
      %s281 = scalar_select %p278, %s279, %s280
      %p284 = pneg %p278
      %p285 = scmp.eq.s32.totalorder %s33, 3
      %p286 = por %p284, %p285
      %p287 = scmp.ne.s32.totalorder %s279, %s282
      %p288 = scmp.eq.s32.totalorder %s33, 0
      %p289 = por %p287, %p288
      %p290 = scmp.ne.s32.totalorder %s279, %s282
      %p291 = scmp.eq.s32.totalorder %s38, 3
      %p292 = por %p290, %p291
      %p293 = scmp.ne.s32.totalorder %s282, %s283
      %p294 = scmp.eq.s32.totalorder %s38, 0
      %p295 = por %p293, %p294
      %p296 = scmp.ne.s32.totalorder %s282, %s283
      %p297 = scmp.eq.s32.totalorder %s39, 3
      %p298 = por %p296, %p297
      %p300 = scmp.ne.s32.totalorder %s283, %s299
      %p301 = scmp.eq.s32.totalorder %s39, 0
      %p302 = por %p300, %p301
      %s303 = ssub.s32 %s41, %s48
      %p304 = scmp.eq.s32.totalorder %s303, 0
      %s306 = sadd.s32 %s305, 1
      %s307 = scalar_select %p304, %s305, %s306
      %p310 = pneg %p304
      %p311 = scmp.eq.s32.totalorder %s33, 3
      %p312 = por %p310, %p311
      %p313 = scmp.ne.s32.totalorder %s305, %s308
      %p314 = scmp.eq.s32.totalorder %s33, 0
      %p315 = por %p313, %p314
      %p316 = scmp.ne.s32.totalorder %s305, %s308
      %p317 = scmp.eq.s32.totalorder %s38, 3
      %p318 = por %p316, %p317
      %p319 = scmp.ne.s32.totalorder %s308, %s309
      %p320 = scmp.eq.s32.totalorder %s38, 0
      %p321 = por %p319, %p320
      %p322 = scmp.ne.s32.totalorder %s308, %s309
      %p323 = scmp.eq.s32.totalorder %s39, 3
      %p324 = por %p322, %p323
      %p326 = scmp.ne.s32.totalorder %s309, %s325
      %p327 = scmp.eq.s32.totalorder %s39, 0
      %p328 = por %p326, %p327
      %s329 = ssub.s32 %s41, %s48
      %p330 = scmp.eq.s32.totalorder %s329, 0
      %s332 = sadd.s32 %s331, 1
      %s333 = scalar_select %p330, %s331, %s332
      %p336 = pneg %p330
      %p337 = scmp.eq.s32.totalorder %s33, 3
      %p338 = por %p336, %p337
      %p339 = scmp.ne.s32.totalorder %s331, %s334
      %p340 = scmp.eq.s32.totalorder %s33, 0
      %p341 = por %p339, %p340
      %p342 = scmp.ne.s32.totalorder %s331, %s334
      %p343 = scmp.eq.s32.totalorder %s38, 3
      %p344 = por %p342, %p343
      %p345 = scmp.ne.s32.totalorder %s334, %s335
      %p346 = scmp.eq.s32.totalorder %s38, 0
      %p347 = por %p345, %p346
      %p348 = scmp.ne.s32.totalorder %s334, %s335
      %p349 = scmp.eq.s32.totalorder %s39, 3
      %p350 = por %p348, %p349
      %p352 = scmp.ne.s32.totalorder %s335, %s351
      %p353 = scmp.eq.s32.totalorder %s39, 0
      %p354 = por %p352, %p353
      %s355 = ssub.s32 %s41, %s48
      %p356 = scmp.eq.s32.totalorder %s355, 0
      %s358 = sadd.s32 %s357, 1
      %s359 = scalar_select %p356, %s357, %s358
      %p362 = pneg %p356
      %p363 = scmp.eq.s32.totalorder %s33, 3
      %p364 = por %p362, %p363
      %p365 = scmp.ne.s32.totalorder %s357, %s360
      %p366 = scmp.eq.s32.totalorder %s33, 0
      %p367 = por %p365, %p366
      %p368 = scmp.ne.s32.totalorder %s357, %s360
      %p369 = scmp.eq.s32.totalorder %s38, 3
      %p370 = por %p368, %p369
      %p371 = scmp.ne.s32.totalorder %s360, %s361
      %p372 = scmp.eq.s32.totalorder %s38, 0
      %p373 = por %p371, %p372
      %p374 = scmp.ne.s32.totalorder %s360, %s361
      %p375 = scmp.eq.s32.totalorder %s39, 3
      %p376 = por %p374, %p375
      %p378 = scmp.ne.s32.totalorder %s361, %s377
      %p379 = scmp.eq.s32.totalorder %s39, 0
      %p380 = por %p378, %p379
      %s381 = ssub.s32 %s41, %s48
      %p382 = scmp.eq.s32.totalorder %s381, 0
      %s384 = sadd.s32 %s383, 1
      %s385 = scalar_select %p382, %s383, %s384
      %p388 = pneg %p382
      %p389 = scmp.eq.s32.totalorder %s33, 3
      %p390 = por %p388, %p389
      %p391 = scmp.ne.s32.totalorder %s383, %s386
      %p392 = scmp.eq.s32.totalorder %s33, 0
      %p393 = por %p391, %p392
      %p394 = scmp.ne.s32.totalorder %s383, %s386
      %p395 = scmp.eq.s32.totalorder %s38, 3
      %p396 = por %p394, %p395
      %p397 = scmp.ne.s32.totalorder %s386, %s387
      %p398 = scmp.eq.s32.totalorder %s38, 0
      %p399 = por %p397, %p398
      %p400 = scmp.ne.s32.totalorder %s386, %s387
      %p401 = scmp.eq.s32.totalorder %s39, 3
      %p402 = por %p400, %p401
      %p404 = scmp.ne.s32.totalorder %s387, %s403
      %p405 = scmp.eq.s32.totalorder %s39, 0
      %p406 = por %p404, %p405
      %s407 = ssub.s32 %s41, %s48
      %p408 = scmp.eq.s32.totalorder %s407, 0
      %s410 = sadd.s32 %s409, 1
      %s411 = scalar_select %p408, %s409, %s410
      %p414 = pneg %p408
      %p415 = scmp.eq.s32.totalorder %s33, 3
      %p416 = por %p414, %p415
      %p417 = scmp.ne.s32.totalorder %s409, %s412
      %p418 = scmp.eq.s32.totalorder %s33, 0
      %p419 = por %p417, %p418
      %p420 = scmp.ne.s32.totalorder %s409, %s412
      %p421 = scmp.eq.s32.totalorder %s38, 3
      %p422 = por %p420, %p421
      %p423 = scmp.ne.s32.totalorder %s412, %s413
      %p424 = scmp.eq.s32.totalorder %s38, 0
      %p425 = por %p423, %p424
      %p426 = scmp.ne.s32.totalorder %s412, %s413
      %p427 = scmp.eq.s32.totalorder %s39, 3
      %p428 = por %p426, %p427
      %p430 = scmp.ne.s32.totalorder %s413, %s429
      %p431 = scmp.eq.s32.totalorder %s39, 0
      %p432 = por %p430, %p431
      %s433 = ssub.s32 %s41, %s48
      %p434 = scmp.eq.s32.totalorder %s433, 0
      %s436 = sadd.s32 %s435, 1
      %s437 = scalar_select %p434, %s435, %s436
      %p440 = pneg %p434
      %p441 = scmp.eq.s32.totalorder %s33, 3
      %p442 = por %p440, %p441
      %p443 = scmp.ne.s32.totalorder %s435, %s438
      %p444 = scmp.eq.s32.totalorder %s33, 0
      %p445 = por %p443, %p444
      %p446 = scmp.ne.s32.totalorder %s435, %s438
      %p447 = scmp.eq.s32.totalorder %s38, 3
      %p448 = por %p446, %p447
      %p449 = scmp.ne.s32.totalorder %s438, %s439
      %p450 = scmp.eq.s32.totalorder %s38, 0
      %p451 = por %p449, %p450
      %p452 = scmp.ne.s32.totalorder %s438, %s439
      %p453 = scmp.eq.s32.totalorder %s39, 3
      %p454 = por %p452, %p453
      %p456 = scmp.ne.s32.totalorder %s439, %s455
      %p457 = scmp.eq.s32.totalorder %s39, 0
      %p458 = por %p456, %p457
      %s459 = ssub.s32 %s41, %s48
      %p460 = scmp.eq.s32.totalorder %s459, 0
      %s462 = sadd.s32 %s461, 1
      %s463 = scalar_select %p460, %s461, %s462
      %p466 = pneg %p460
      %p467 = scmp.eq.s32.totalorder %s33, 3
      %p468 = por %p466, %p467
      %p469 = scmp.ne.s32.totalorder %s461, %s464
      %p470 = scmp.eq.s32.totalorder %s33, 0
      %p471 = por %p469, %p470
      %p472 = scmp.ne.s32.totalorder %s461, %s464
      %p473 = scmp.eq.s32.totalorder %s38, 3
      %p474 = por %p472, %p473
      %p475 = scmp.ne.s32.totalorder %s464, %s465
      %p476 = scmp.eq.s32.totalorder %s38, 0
      %p477 = por %p475, %p476
      %p478 = scmp.ne.s32.totalorder %s464, %s465
      %p479 = scmp.eq.s32.totalorder %s39, 3
      %p480 = por %p478, %p479
      %p482 = scmp.ne.s32.totalorder %s465, %s481
      %p483 = scmp.eq.s32.totalorder %s39, 0
      %p484 = por %p482, %p483
      %s485 = ssub.s32 %s41, %s48
      %p486 = scmp.eq.s32.totalorder %s485, 0
      %s488 = sadd.s32 %s487, 1
      %s489 = scalar_select %p486, %s487, %s488
      %p492 = pneg %p486
      %p493 = scmp.eq.s32.totalorder %s33, 3
      %p494 = por %p492, %p493
      %p495 = scmp.ne.s32.totalorder %s487, %s490
      %p496 = scmp.eq.s32.totalorder %s33, 0
      %p497 = por %p495, %p496
      %p498 = scmp.ne.s32.totalorder %s487, %s490
      %p499 = scmp.eq.s32.totalorder %s38, 3
      %p500 = por %p498, %p499
      %p501 = scmp.ne.s32.totalorder %s490, %s491
      %p502 = scmp.eq.s32.totalorder %s38, 0
      %p503 = por %p501, %p502
      %p504 = scmp.ne.s32.totalorder %s490, %s491
      %p505 = scmp.eq.s32.totalorder %s39, 3
      %p506 = por %p504, %p505
      %p508 = scmp.ne.s32.totalorder %s491, %s507
      %p509 = scmp.eq.s32.totalorder %s39, 0
      %p510 = por %p508, %p509
      %s511 = ssub.s32 %s41, %s48
      %p512 = scmp.eq.s32.totalorder %s511, 0
      %s514 = sadd.s32 %s513, 1
      %s515 = scalar_select %p512, %s513, %s514
      %p518 = pneg %p512
      %p519 = scmp.eq.s32.totalorder %s33, 3
      %p520 = por %p518, %p519
      %p521 = scmp.ne.s32.totalorder %s513, %s516
      %p522 = scmp.eq.s32.totalorder %s33, 0
      %p523 = por %p521, %p522
      %p524 = scmp.ne.s32.totalorder %s513, %s516
      %p525 = scmp.eq.s32.totalorder %s38, 3
      %p526 = por %p524, %p525
      %p527 = scmp.ne.s32.totalorder %s516, %s517
      %p528 = scmp.eq.s32.totalorder %s38, 0
      %p529 = por %p527, %p528
      %p530 = scmp.ne.s32.totalorder %s516, %s517
      %p531 = scmp.eq.s32.totalorder %s39, 3
      %p532 = por %p530, %p531
      %p534 = scmp.ne.s32.totalorder %s517, %s533
      %p535 = scmp.eq.s32.totalorder %s39, 0
      %p536 = por %p534, %p535
      %s538 = sadd.s32 %s537, 1
      %p541 = scmp.eq.s32.totalorder %s33, 3
      %p542 = scmp.ne.s32.totalorder %s537, %s539
      %p543 = scmp.eq.s32.totalorder %s33, 0
      %p544 = por %p542, %p543
      %p545 = scmp.ne.s32.totalorder %s537, %s539
      %p546 = scmp.eq.s32.totalorder %s38, 3
      %p547 = por %p545, %p546
      %p548 = scmp.ne.s32.totalorder %s539, %s540
      %p549 = scmp.eq.s32.totalorder %s38, 0
      %p550 = por %p548, %p549
      %p551 = scmp.ne.s32.totalorder %s539, %s540
      %p552 = scmp.eq.s32.totalorder %s39, 3
      %p553 = por %p551, %p552
      %p555 = scmp.ne.s32.totalorder %s540, %s554
      %p556 = scmp.eq.s32.totalorder %s39, 0
      %p557 = por %p555, %p556
      %s559 = sadd.s32 %s558, 1
      %p562 = scmp.eq.s32.totalorder %s33, 3
      %p563 = scmp.ne.s32.totalorder %s558, %s560
      %p564 = scmp.eq.s32.totalorder %s33, 0
      %p565 = por %p563, %p564
      %p566 = scmp.ne.s32.totalorder %s558, %s560
      %p567 = scmp.eq.s32.totalorder %s38, 3
      %p568 = por %p566, %p567
      %p569 = scmp.ne.s32.totalorder %s560, %s561
      %p570 = scmp.eq.s32.totalorder %s38, 0
      %p571 = por %p569, %p570
      %p572 = scmp.ne.s32.totalorder %s560, %s561
      %p573 = scmp.eq.s32.totalorder %s39, 3
      %p574 = por %p572, %p573
      %p576 = scmp.ne.s32.totalorder %s561, %s575
      %p577 = scmp.eq.s32.totalorder %s39, 0
      %p578 = por %p576, %p577
      %s579 = ssub.s32 %s40, %s52
      %p580 = scmp.eq.s32.totalorder %s579, 0
      %s582 = sadd.s32 %s581, 1
      %s583 = scalar_select %p580, %s581, %s582
      %p586 = pneg %p580
      %p587 = scmp.eq.s32.totalorder %s33, 3
      %p588 = por %p586, %p587
      %p589 = scmp.ne.s32.totalorder %s581, %s584
      %p590 = scmp.eq.s32.totalorder %s33, 0
      %p591 = por %p589, %p590
      %p592 = scmp.ne.s32.totalorder %s581, %s584
      %p593 = scmp.eq.s32.totalorder %s38, 3
      %p594 = por %p592, %p593
      %p595 = scmp.ne.s32.totalorder %s584, %s585
      %p596 = scmp.eq.s32.totalorder %s38, 0
      %p597 = por %p595, %p596
      %p598 = scmp.ne.s32.totalorder %s584, %s585
      %p599 = scmp.eq.s32.totalorder %s39, 3
      %p600 = por %p598, %p599
      %p602 = scmp.ne.s32.totalorder %s585, %s601
      %p603 = scmp.eq.s32.totalorder %s39, 0
      %p604 = por %p602, %p603
      %p605 = scmp.le.s32.totalorder 1, %s33
      %p606 = scmp.lt.s32.totalorder %s33, 5
      %p607 = pnand %p605, %p606
      %p608 = pneg %p607
      // Predicated region
      $region9: #{tpu_custom_call.1} parent=5 // pred_check
        _
      $region10: #{tpu_custom_call.1} parent=5 // pred_check_branch
        %610 = sbr.rel (%p607) target = $region12
      $region11: #{tpu_custom_call.1} parent=5 // pred_region
        %s611 = ssub.s32 %s33, 1
        // Predicated region
        $region13: #{tpu_custom_call.1} parent=11 // pred_check
          %p612 = pneg %p92
        $region14: #{tpu_custom_call.1} parent=11 // pred_check_branch
          %614 = sbr.rel (%p612) target = $region16
        $region15: #{tpu_custom_call.1} parent=11 // pred_region
          _
        $region16: #{tpu_custom_call.1} parent=11 // pred_fallthru
          _
        // Predicated region
        $region17: #{tpu_custom_call.1} parent=11 // pred_check
          %p615 = pneg %p113
        $region18: #{tpu_custom_call.1} parent=11 // pred_check_branch
          %617 = sbr.rel (%p615) target = $region20
        $region19: #{tpu_custom_call.1} parent=11 // pred_region
          _
        $region20: #{tpu_custom_call.1} parent=11 // pred_fallthru
          _
        // Predicated region
        $region21: #{tpu_custom_call.1} parent=11 // pred_check
          %p618 = pneg %p550
        $region22: #{tpu_custom_call.1} parent=11 // pred_check_branch
          %620 = sbr.rel (%p618) target = $region24
        $region23: #{tpu_custom_call.1} parent=11 // pred_region
          _
        $region24: #{tpu_custom_call.1} parent=11 // pred_fallthru
          _
        // Predicated region
        $region25: #{tpu_custom_call.1} parent=11 // pred_check
          %p621 = pneg %p571
        $region26: #{tpu_custom_call.1} parent=11 // pred_check_branch
          %623 = sbr.rel (%p621) target = $region28
        $region27: #{tpu_custom_call.1} parent=11 // pred_region
          _
        $region28: #{tpu_custom_call.1} parent=11 // pred_fallthru
          _
      $region12: #{tpu_custom_call.1} parent=5 // pred_fallthru
        _
      %p624 = scmp.lt.s32.totalorder %s33, 4
      // Predicated region
      $region29: #{tpu_custom_call.1} parent=5 // pred_check
        %p625 = pneg %p624
      $region30: #{tpu_custom_call.1} parent=5 // pred_check_branch
        %627 = sbr.rel (%p625) target = $region32
      $region31: #{tpu_custom_call.1} parent=5 // pred_region
        // Predicated region
        $region33: #{tpu_custom_call.1} parent=31 // pred_check
          %p628 = pneg %p65
        $region34: #{tpu_custom_call.1} parent=31 // pred_check_branch
          %630 = sbr.rel (%p628) target = $region36
        $region35: #{tpu_custom_call.1} parent=31 // pred_region
          %p631 = scmp.lt.s32.totalorder %s40, 1
          %s632 = scalar_select %p631, %s40, 1
          %s633 = smul.addr %s632, 8
          %s634 = scalar_lea.vmem %s0, %s633
        $region36: #{tpu_custom_call.1} parent=31 // pred_fallthru
          _
        // Predicated region
        $region37: #{tpu_custom_call.1} parent=31 // pred_check
          %p635 = pneg %p133
        $region38: #{tpu_custom_call.1} parent=31 // pred_check_branch
          %637 = sbr.rel (%p635) target = $region40
        $region39: #{tpu_custom_call.1} parent=31 // pred_region
          %p638 = scmp.lt.s32.totalorder %s41, 1
          %s639 = scalar_select %p638, %s41, 1
          %s640 = smul.addr %s639, 4
          %s641 = smul.addr %s640, 8
          %s642 = scalar_lea.vmem %s3, %s641
        $region40: #{tpu_custom_call.1} parent=31 // pred_fallthru
          _
        // Predicated region
        $region41: #{tpu_custom_call.1} parent=31 // pred_check
          %p643 = pneg %p159
        $region42: #{tpu_custom_call.1} parent=31 // pred_check_branch
          %645 = sbr.rel (%p643) target = $region44
        $region43: #{tpu_custom_call.1} parent=31 // pred_region
          %p646 = scmp.lt.s32.totalorder %s41, 1
          %s647 = scalar_select %p646, %s41, 1
          %s648 = scalar_lea.vmem %s4, %s647
        $region44: #{tpu_custom_call.1} parent=31 // pred_fallthru
          _
        // Predicated region
        $region45: #{tpu_custom_call.1} parent=31 // pred_check
          %p649 = pneg %p185
        $region46: #{tpu_custom_call.1} parent=31 // pred_check_branch
          %651 = sbr.rel (%p649) target = $region48
        $region47: #{tpu_custom_call.1} parent=31 // pred_region
          %p652 = scmp.lt.s32.totalorder %s41, 1
          %s653 = scalar_select %p652, %s41, 1
          %s654 = smul.addr %s653, 4
          %s655 = smul.addr %s654, 8
          %s656 = scalar_lea.vmem %s5, %s655
        $region48: #{tpu_custom_call.1} parent=31 // pred_fallthru
          _
        // Predicated region
        $region49: #{tpu_custom_call.1} parent=31 // pred_check
          %p657 = pneg %p211
        $region50: #{tpu_custom_call.1} parent=31 // pred_check_branch
          %659 = sbr.rel (%p657) target = $region52
        $region51: #{tpu_custom_call.1} parent=31 // pred_region
          %p660 = scmp.lt.s32.totalorder %s41, 1
          %s661 = scalar_select %p660, %s41, 1
          %s662 = scalar_lea.vmem %s6, %s661
        $region52: #{tpu_custom_call.1} parent=31 // pred_fallthru
          _
        // Predicated region
        $region53: #{tpu_custom_call.1} parent=31 // pred_check
          %p663 = pneg %p237
        $region54: #{tpu_custom_call.1} parent=31 // pred_check_branch
          %665 = sbr.rel (%p663) target = $region56
        $region55: #{tpu_custom_call.1} parent=31 // pred_region
          %p666 = scmp.lt.s32.totalorder %s41, 1
          %s667 = scalar_select %p666, %s41, 1
          %s668 = smul.addr %s667, 4
          %s669 = smul.addr %s668, 8
          %s670 = scalar_lea.vmem %s7, %s669
        $region56: #{tpu_custom_call.1} parent=31 // pred_fallthru
          _
        // Predicated region
        $region57: #{tpu_custom_call.1} parent=31 // pred_check
          %p671 = pneg %p263
        $region58: #{tpu_custom_call.1} parent=31 // pred_check_branch
          %673 = sbr.rel (%p671) target = $region60
        $region59: #{tpu_custom_call.1} parent=31 // pred_region
          %p674 = scmp.lt.s32.totalorder %s41, 1
          %s675 = scalar_select %p674, %s41, 1
          %s676 = scalar_lea.vmem %s8, %s675
        $region60: #{tpu_custom_call.1} parent=31 // pred_fallthru
          _
        // Predicated region
        $region61: #{tpu_custom_call.1} parent=31 // pred_check
          %p677 = pneg %p289
        $region62: #{tpu_custom_call.1} parent=31 // pred_check_branch
          %679 = sbr.rel (%p677) target = $region64
        $region63: #{tpu_custom_call.1} parent=31 // pred_region
          %s680 = sand.u32 %s279, 1
          %s681 = scalar_lea.sflag [#allocation4], %s680
          %s682 = sand.u32 %s279, 1
          %s683 = smul.addr %s682, 32
          %s684 = scalar_lea.vmem [#allocation3], %s683
          %s686 = ssub.s32 512, 512
          %687 = vsyncadd %s681, %s686
          %s688 = smul.addr %s41, 4
          %s689 = smul.addr %s688, 128
          %s690 = scalar_lea.hbm %s9, %s689
          %s691 = sshll.u32 %s684, 4
          %s692 = int_to_ptr.vmem [resolvable:$true] %s691
          %697 = dma.hbm_to_vmem [thread:$0]  %s690, 512, %s692, %s681, 128, 128, 8
        $region64: #{tpu_custom_call.1} parent=31 // pred_fallthru
          _
        // Predicated region
        $region65: #{tpu_custom_call.1} parent=31 // pred_check
          %p698 = pneg %p315
        $region66: #{tpu_custom_call.1} parent=31 // pred_check_branch
          %700 = sbr.rel (%p698) target = $region68
        $region67: #{tpu_custom_call.1} parent=31 // pred_region
          %p701 = scmp.lt.s32.totalorder %s41, 1
          %s702 = scalar_select %p701, %s41, 1
          %s703 = scalar_lea.vmem %s10, %s702
        $region68: #{tpu_custom_call.1} parent=31 // pred_fallthru
          _
        // Predicated region
        $region69: #{tpu_custom_call.1} parent=31 // pred_check
          %p704 = pneg %p341
        $region70: #{tpu_custom_call.1} parent=31 // pred_check_branch
          %706 = sbr.rel (%p704) target = $region72
        $region71: #{tpu_custom_call.1} parent=31 // pred_region
          %p707 = scmp.lt.s32.totalorder %s41, 1
          %s708 = scalar_select %p707, %s41, 1
          %s709 = scalar_lea.vmem %s11, %s708
        $region72: #{tpu_custom_call.1} parent=31 // pred_fallthru
          _
        // Predicated region
        $region73: #{tpu_custom_call.1} parent=31 // pred_check
          %p710 = pneg %p367
        $region74: #{tpu_custom_call.1} parent=31 // pred_check_branch
          %712 = sbr.rel (%p710) target = $region76
        $region75: #{tpu_custom_call.1} parent=31 // pred_region
          %p713 = scmp.lt.s32.totalorder %s41, 1
          %s714 = scalar_select %p713, %s41, 1
          %s715 = scalar_lea.vmem %s12, %s714
        $region76: #{tpu_custom_call.1} parent=31 // pred_fallthru
          _
        // Predicated region
        $region77: #{tpu_custom_call.1} parent=31 // pred_check
          %p716 = pneg %p393
        $region78: #{tpu_custom_call.1} parent=31 // pred_check_branch
          %718 = sbr.rel (%p716) target = $region80
        $region79: #{tpu_custom_call.1} parent=31 // pred_region
          %s719 = sand.u32 %s383, 1
          %s720 = scalar_lea.sflag [#allocation6], %s719
          %s721 = sand.u32 %s383, 1
          %s722 = smul.addr %s721, 32
          %s723 = scalar_lea.vmem [#allocation5], %s722
          %s725 = ssub.s32 512, 512
          %726 = vsyncadd %s720, %s725
          %s727 = smul.addr %s41, 4
          %s728 = smul.addr %s727, 128
          %s729 = scalar_lea.hbm %s13, %s728
          %s730 = sshll.u32 %s723, 4
          %s731 = int_to_ptr.vmem [resolvable:$true] %s730
          %736 = dma.hbm_to_vmem [thread:$0]  %s729, 512, %s731, %s720, 128, 128, 8
        $region80: #{tpu_custom_call.1} parent=31 // pred_fallthru
          _
        // Predicated region
        $region81: #{tpu_custom_call.1} parent=31 // pred_check
          %p737 = pneg %p419
        $region82: #{tpu_custom_call.1} parent=31 // pred_check_branch
          %739 = sbr.rel (%p737) target = $region84
        $region83: #{tpu_custom_call.1} parent=31 // pred_region
          %p740 = scmp.lt.s32.totalorder %s41, 1
          %s741 = scalar_select %p740, %s41, 1
          %s742 = scalar_lea.vmem %s14, %s741
        $region84: #{tpu_custom_call.1} parent=31 // pred_fallthru
          _
        // Predicated region
        $region85: #{tpu_custom_call.1} parent=31 // pred_check
          %p743 = pneg %p445
        $region86: #{tpu_custom_call.1} parent=31 // pred_check_branch
          %745 = sbr.rel (%p743) target = $region88
        $region87: #{tpu_custom_call.1} parent=31 // pred_region
          %p746 = scmp.lt.s32.totalorder %s41, 1
          %s747 = scalar_select %p746, %s41, 1
          %s748 = smul.addr %s747, 8
          %s749 = smul.addr %s748, 8
          %s750 = scalar_lea.vmem %s15, %s749
        $region88: #{tpu_custom_call.1} parent=31 // pred_fallthru
          _
        // Predicated region
        $region89: #{tpu_custom_call.1} parent=31 // pred_check
          %p751 = pneg %p471
        $region90: #{tpu_custom_call.1} parent=31 // pred_check_branch
          %753 = sbr.rel (%p751) target = $region92
        $region91: #{tpu_custom_call.1} parent=31 // pred_region
          %p754 = scmp.lt.s32.totalorder %s41, 1
          %s755 = scalar_select %p754, %s41, 1
          %s756 = scalar_lea.vmem %s16, %s755
        $region92: #{tpu_custom_call.1} parent=31 // pred_fallthru
          _
        // Predicated region
        $region93: #{tpu_custom_call.1} parent=31 // pred_check
          %p757 = pneg %p497
        $region94: #{tpu_custom_call.1} parent=31 // pred_check_branch
          %759 = sbr.rel (%p757) target = $region96
        $region95: #{tpu_custom_call.1} parent=31 // pred_region
          %p760 = scmp.lt.s32.totalorder %s41, 1
          %s761 = scalar_select %p760, %s41, 1
          %s762 = scalar_lea.vmem %s17, %s761
        $region96: #{tpu_custom_call.1} parent=31 // pred_fallthru
          _
        // Predicated region
        $region97: #{tpu_custom_call.1} parent=31 // pred_check
          %p763 = pneg %p523
        $region98: #{tpu_custom_call.1} parent=31 // pred_check_branch
          %765 = sbr.rel (%p763) target = $region100
        $region99: #{tpu_custom_call.1} parent=31 // pred_region
          %p766 = scmp.lt.s32.totalorder %s41, 1
          %s767 = scalar_select %p766, %s41, 1
          %s768 = scalar_lea.vmem %s18, %s767
        $region100: #{tpu_custom_call.1} parent=31 // pred_fallthru
          _
      $region32: #{tpu_custom_call.1} parent=5 // pred_fallthru
        _
      %p769 = scmp.le.s32.totalorder 1, %s33
      %p770 = scmp.lt.s32.totalorder %s33, 5
      %p771 = pnand %p769, %p770
      %p772 = pneg %p771
      // Predicated region
      $region101: #{tpu_custom_call.1} parent=5 // pred_check
        _
      $region102: #{tpu_custom_call.1} parent=5 // pred_check_branch
        %774 = sbr.rel (%p771) target = $region104
      $region103: #{tpu_custom_call.1} parent=5 // pred_region
        %s775 = ssub.s32 %s33, 1
        %s776 = sand.u32 %s282, 1
        %s777 = scalar_lea.sflag [#allocation4], %s776
        %s778 = sand.u32 %s282, 1
        %s779 = smul.addr %s778, 32
        %s780 = scalar_lea.vmem [#allocation3], %s779
        // Predicated region
        $region105: #{tpu_custom_call.1} parent=103 // pred_check
          %p781 = pneg %p295
        $region106: #{tpu_custom_call.1} parent=103 // pred_check_branch
          %783 = sbr.rel (%p781) target = $region108
        $region107: #{tpu_custom_call.1} parent=103 // pred_region
          %784 = dma.done %s777, 512
        $region108: #{tpu_custom_call.1} parent=103 // pred_fallthru
          _
        %s785 = sand.u32 %s386, 1
        %s786 = scalar_lea.sflag [#allocation6], %s785
        %s787 = sand.u32 %s386, 1
        %s788 = smul.addr %s787, 32
        %s789 = scalar_lea.vmem [#allocation5], %s788
        // Predicated region
        $region109: #{tpu_custom_call.1} parent=103 // pred_check
          %p790 = pneg %p399
        $region110: #{tpu_custom_call.1} parent=103 // pred_check_branch
          %792 = sbr.rel (%p790) target = $region112
        $region111: #{tpu_custom_call.1} parent=103 // pred_region
          %793 = dma.done %s786, 512
        $region112: #{tpu_custom_call.1} parent=103 // pred_fallthru
          _
        %p794 = scmp.lt.s32.totalorder %s42, 1
        %s795 = scalar_select %p794, %s42, 1
        %s796 = smul.addr %s795, 8
        %s797 = scalar_lea.vmem %s0, %s796
        %p798 = pneg %p71
        %p799 = pneg %p68
        %p800 = pneg %p92
        %p801 = pneg %p89
        %p802 = pneg %p113
        %p803 = pneg %p110
        %p804 = scmp.lt.s32.totalorder %s43, 1
        %s805 = scalar_select %p804, %s43, 1
        %s806 = smul.addr %s805, 4
        %s807 = smul.addr %s806, 8
        %s808 = scalar_lea.vmem %s3, %s807
        %p809 = pneg %p139
        %p810 = pneg %p136
        %p811 = scmp.lt.s32.totalorder %s43, 1
        %s812 = scalar_select %p811, %s43, 1
        %s813 = scalar_lea.vmem %s4, %s812
        %p814 = pneg %p165
        %p815 = pneg %p162
        %p816 = scmp.lt.s32.totalorder %s43, 1
        %s817 = scalar_select %p816, %s43, 1
        %s818 = smul.addr %s817, 4
        %s819 = smul.addr %s818, 8
        %s820 = scalar_lea.vmem %s5, %s819
        %p821 = pneg %p191
        %p822 = pneg %p188
        %p823 = scmp.lt.s32.totalorder %s43, 1
        %s824 = scalar_select %p823, %s43, 1
        %s825 = scalar_lea.vmem %s6, %s824
        %p826 = pneg %p217
        %p827 = pneg %p214
        %p828 = scmp.lt.s32.totalorder %s43, 1
        %s829 = scalar_select %p828, %s43, 1
        %s830 = smul.addr %s829, 4
        %s831 = smul.addr %s830, 8
        %s832 = scalar_lea.vmem %s7, %s831
        %p833 = pneg %p243
        %p834 = pneg %p240
        %p835 = scmp.lt.s32.totalorder %s43, 1
        %s836 = scalar_select %p835, %s43, 1
        %s837 = scalar_lea.vmem %s8, %s836
        %p838 = pneg %p269
        %p839 = pneg %p266
        %s840 = sand.u32 %s282, 1
        %s841 = scalar_lea.sflag [#allocation4], %s840
        %s842 = sand.u32 %s282, 1
        %s843 = smul.addr %s842, 32
        %s844 = scalar_lea.vmem [#allocation3], %s843
        %p845 = pneg %p295
        %p846 = pneg %p292
        %p847 = scmp.lt.s32.totalorder %s43, 1
        %s848 = scalar_select %p847, %s43, 1
        %s849 = scalar_lea.vmem %s10, %s848
        %p850 = pneg %p321
        %p851 = pneg %p318
        %p852 = scmp.lt.s32.totalorder %s43, 1
        %s853 = scalar_select %p852, %s43, 1
        %s854 = scalar_lea.vmem %s11, %s853
        %p855 = pneg %p347
        %p856 = pneg %p344
        %p857 = scmp.lt.s32.totalorder %s43, 1
        %s858 = scalar_select %p857, %s43, 1
        %s859 = scalar_lea.vmem %s12, %s858
        %p860 = pneg %p373
        %p861 = pneg %p370
        %s862 = sand.u32 %s386, 1
        %s863 = scalar_lea.sflag [#allocation6], %s862
        %s864 = sand.u32 %s386, 1
        %s865 = smul.addr %s864, 32
        %s866 = scalar_lea.vmem [#allocation5], %s865
        %p867 = pneg %p399
        %p868 = pneg %p396
        %p869 = scmp.lt.s32.totalorder %s43, 1
        %s870 = scalar_select %p869, %s43, 1
        %s871 = scalar_lea.vmem %s14, %s870
        %p872 = pneg %p425
        %p873 = pneg %p422
        %p874 = scmp.lt.s32.totalorder %s43, 1
        %s875 = scalar_select %p874, %s43, 1
        %s876 = smul.addr %s875, 8
        %s877 = smul.addr %s876, 8
        %s878 = scalar_lea.vmem %s15, %s877
        %p879 = pneg %p451
        %p880 = pneg %p448
        %p881 = scmp.lt.s32.totalorder %s43, 1
        %s882 = scalar_select %p881, %s43, 1
        %s883 = scalar_lea.vmem %s16, %s882
        %p884 = pneg %p477
        %p885 = pneg %p474
        %p886 = scmp.lt.s32.totalorder %s43, 1
        %s887 = scalar_select %p886, %s43, 1
        %s888 = scalar_lea.vmem %s17, %s887
        %p889 = pneg %p503
        %p890 = pneg %p500
        %p891 = scmp.lt.s32.totalorder %s43, 1
        %s892 = scalar_select %p891, %s43, 1
        %s893 = scalar_lea.vmem %s18, %s892
        %p894 = pneg %p529
        %p895 = pneg %p526
        %p896 = pneg %p550
        %p897 = pneg %p547
        %p898 = pneg %p571
        %p899 = pneg %p568
        %p900 = pneg %p597
        %p901 = pneg %p594
        %p902 = scmp.lt.s32.totalorder %s42, 1
        %s903 = scalar_select %p902, %s42, 1
        %s904 = smul.addr %s903, 8
        %s905 = scalar_lea.vmem %s21, %s904
        %p906 = scmp.lt.s32.totalorder %s42, 1
        %s907 = scalar_select %p906, %s42, 1
        %s908 = smul.addr %s907, 8
        %s909 = scalar_lea.vmem %s0, %s908
        %p910 = scmp.lt.s32.totalorder %s43, 1
        %s911 = scalar_select %p910, %s43, 1
        %s912 = smul.addr %s911, 4
        %s913 = smul.addr %s912, 8
        %s914 = scalar_lea.vmem %s3, %s913
        %p915 = scmp.lt.s32.totalorder %s43, 1
        %s916 = scalar_select %p915, %s43, 1
        %s917 = scalar_lea.vmem %s4, %s916
        %p918 = scmp.lt.s32.totalorder %s43, 1
        %s919 = scalar_select %p918, %s43, 1
        %s920 = smul.addr %s919, 4
        %s921 = smul.addr %s920, 8
        %s922 = scalar_lea.vmem %s5, %s921
        %p923 = scmp.lt.s32.totalorder %s43, 1
        %s924 = scalar_select %p923, %s43, 1
        %s925 = scalar_lea.vmem %s6, %s924
        %p926 = scmp.lt.s32.totalorder %s43, 1
        %s927 = scalar_select %p926, %s43, 1
        %s928 = smul.addr %s927, 4
        %s929 = smul.addr %s928, 8
        %s930 = scalar_lea.vmem %s7, %s929
        %p931 = scmp.lt.s32.totalorder %s43, 1
        %s932 = scalar_select %p931, %s43, 1
        %s933 = scalar_lea.vmem %s8, %s932
        %p934 = scmp.lt.s32.totalorder %s43, 1
        %s935 = scalar_select %p934, %s43, 1
        %s936 = scalar_lea.vmem %s10, %s935
        %p937 = scmp.lt.s32.totalorder %s43, 1
        %s938 = scalar_select %p937, %s43, 1
        %s939 = scalar_lea.vmem %s11, %s938
        %p940 = scmp.lt.s32.totalorder %s43, 1
        %s941 = scalar_select %p940, %s43, 1
        %s942 = scalar_lea.vmem %s12, %s941
        %p943 = scmp.lt.s32.totalorder %s43, 1
        %s944 = scalar_select %p943, %s43, 1
        %s945 = scalar_lea.vmem %s14, %s944
        %p946 = scmp.lt.s32.totalorder %s43, 1
        %s947 = scalar_select %p946, %s43, 1
        %s948 = smul.addr %s947, 8
        %s949 = smul.addr %s948, 8
        %s950 = scalar_lea.vmem %s15, %s949
        %p951 = scmp.lt.s32.totalorder %s43, 1
        %s952 = scalar_select %p951, %s43, 1
        %s953 = scalar_lea.vmem %s16, %s952
        %p954 = scmp.lt.s32.totalorder %s43, 1
        %s955 = scalar_select %p954, %s43, 1
        %s956 = scalar_lea.vmem %s17, %s955
        %p957 = scmp.lt.s32.totalorder %s43, 1
        %s958 = scalar_select %p957, %s43, 1
        %s959 = scalar_lea.vmem %s18, %s958
        %p960 = scmp.lt.s32.totalorder %s42, 1
        %s961 = scalar_select %p960, %s42, 1
        %s962 = smul.addr %s961, 8
        %s963 = scalar_lea.vmem %s21, %s962
        %p964 = scmp.eq.s32.totalorder %s43, 0
        // Predicated region
        $region113: #{tpu_custom_call.1} parent=103 // pred_check
          %p965 = pneg %p964
        $region114: #{tpu_custom_call.1} parent=103 // pred_check_branch
          %967 = sbr.rel (%p965) target = $region116
        $region115: #{tpu_custom_call.1} parent=103 // pred_region
          %v968 = vld [vmem:[%s909] sm:$0xff]
          %v969 = vld [vmem:[%s1] sm:$0xf]
          %v970 = vld [vmem:[%s2] sm:$0x1]
          %v972 = vlaneseq
          %v973 = vshrl.u32 %v972, 7
          %v974 = vsub.s32 0, %v973
          %v975 = vrot.slane %v970, %v974
          %vm977 = vcmask 31744
          %v979 = vsel %vm977, %v968, 0
          %vm981 = vcmask 1043456
          %v983 = vsel %vm981, %v969, 0
          %985 = vmatprep.subr.mxu0 0.0
          %986 = vmatpush1.msra.mxu0 %v983
          %987 = vmatprep.subr.mxu0 0.0
          %988 = vmatpush1.msra.mxu0 0.0
          %989 = vmatprep.subr.mxu0 0.0
          %990 = vmatpush1.msra.mxu0 0.0
          %991 = vmatprep.subr.mxu0 0.0
          %992 = vmatpush1.msra.mxu0 0.0
          %993 = vmatprep.subr.mxu0 0.0
          %994 = vmatpush1.msra.mxu0 0.0
          %995 = vmatprep.subr.mxu0 0.0
          %996 = vmatpush1.msra.mxu0 0.0
          %997 = vmatprep.subr.mxu0 0.0
          %998 = vmatpush1.msra.mxu0 0.0
          %999 = vmatprep.subr.mxu0 0.0
          %1000 = vmatpush1.msra.mxu0 0.0
          %1001 = vmatprep.subr.mxu0 0.0
          %1002 = vmatpush1.msra.mxu0 0.0
          %1003 = vmatprep.subr.mxu0 0.0
          %1004 = vmatpush1.msra.mxu0 0.0
          %1005 = vmatprep.subr.mxu0 0.0
          %1006 = vmatpush1.msra.mxu0 0.0
          %1007 = vmatprep.subr.mxu0 0.0
          %1008 = vmatpush1.msra.mxu0 0.0
          %1009 = vmatprep.subr.mxu0 0.0
          %1010 = vmatpush1.msra.mxu0 0.0
          %1011 = vmatprep.subr.mxu0 0.0
          %1012 = vmatpush1.msra.mxu0 0.0
          %1013 = vmatprep.subr.mxu0 0.0
          %1014 = vmatpush1.msra.mxu0 0.0
          %1015 = vmatprep.subr.mxu0 0.0
          %1016 = vmatpush1.msra.mxu0 0.0
          %1017 = vmatprep.subr.mxu0 0.0
          %1018 = vmatpush1.msra.mxu0 0.0
          %1019 = vmatprep.subr.mxu0 0.0
          %1020 = vmatpush1.msra.mxu0 0.0
          %1021 = vmatprep.subr.mxu0 0.0
          %1022 = vmatpush1.msra.mxu0 0.0
          %1023 = vmatprep.subr.mxu0 0.0
          %1024 = vmatpush1.msra.mxu0 0.0
          %1025 = vmatprep.subr.mxu0 0.0
          %1026 = vmatpush1.msra.mxu0 0.0
          %1027 = vmatprep.subr.mxu0 0.0
          %1028 = vmatpush1.msra.mxu0 0.0
          %1029 = vmatprep.subr.mxu0 0.0
          %1030 = vmatpush1.msra.mxu0 0.0
          %1031 = vmatprep.subr.mxu0 0.0
          %1032 = vmatpush1.msra.mxu0 0.0
          %1033 = vmatprep.subr.mxu0 0.0
          %1034 = vmatpush1.msra.mxu0 0.0
          %1035 = vmatprep.subr.mxu0 0.0
          %1036 = vmatpush1.msra.mxu0 0.0
          %1037 = vmatprep.subr.mxu0 0.0
          %1038 = vmatpush1.msra.mxu0 0.0
          %1039 = vmatprep.subr.mxu0 0.0
          %1040 = vmatpush1.msra.mxu0 0.0
          %1041 = vmatprep.subr.mxu0 0.0
          %1042 = vmatpush1.msra.mxu0 0.0
          %1043 = vmatprep.subr.mxu0 0.0
          %1044 = vmatpush1.msra.mxu0 0.0
          %1045 = vmatprep.subr.mxu0 0.0
          %1046 = vmatpush1.msra.mxu0 0.0
          %1047 = vmatprep.subr.mxu0 0.0
          %1048 = vmatpush1.msra.mxu0 0.0
          %1049 = vmatprep.mubr.f32.mxu0 0.0
          %1050 = vmatmul.mubr.f32.gmra.mrb[0].mxu0 %v979
          %v1051 = vpop.f32.mrb[0].mxu0
          %v1052 = vadd.f32 %v975, %v1051
          %v1053 = vpop.f32.mrb[0].mxu0
          %1054 = vdwg.mxu0
          %vm1055 = vcmask 261120
          %1056 = vst.msk [vmem:[#allocation2] sm:$0xff] %vm1055, %v1052
        $region116: #{tpu_custom_call.1} parent=103 // pred_fallthru
          _
        %v1057 = vld [vmem:[#allocation2] sm:$0xff]
        %v1058 = vld [vmem:[%s914] sm:$0xff]
        %v1059 = vld [vmem:[%s914 + $0x8] sm:$0xff]
        %v1060 = vld [vmem:[%s914 + $0x10] sm:$0xff]
        %v1061 = vld [vmem:[%s914 + $0x18] sm:$0xff]
        %v1062 = vld [vmem:[%s917] sm:$0x1]
        %v1064 = vlaneseq
        %v1065 = vshrl.u32 %v1064, 7
        %v1066 = vsub.s32 0, %v1065
        %v1067 = vrot.slane %v1062, %v1066
        %vm1069 = vcmask 261120
        %v1071 = vsel %vm1069, %v1057, 0
        %1073 = vmatprep.subr.mxu0 0.0
        %1074 = vmatpush1.msra.mxu0 %v1058
        %1075 = vmatprep.subr.mxu0 0.0
        %1076 = vmatpush1.msra.mxu0 %v1059
        %1077 = vmatprep.subr.mxu0 0.0
        %1078 = vmatpush1.msra.mxu0 %v1060
        %1079 = vmatprep.subr.mxu0 0.0
        %1080 = vmatpush1.msra.mxu0 %v1061
        %1081 = vmatprep.subr.mxu0 0.0
        %1082 = vmatpush1.msra.mxu0 0.0
        %1083 = vmatprep.subr.mxu0 0.0
        %1084 = vmatpush1.msra.mxu0 0.0
        %1085 = vmatprep.subr.mxu0 0.0
        %1086 = vmatpush1.msra.mxu0 0.0
        %1087 = vmatprep.subr.mxu0 0.0
        %1088 = vmatpush1.msra.mxu0 0.0
        %1089 = vmatprep.subr.mxu0 0.0
        %1090 = vmatpush1.msra.mxu0 0.0
        %1091 = vmatprep.subr.mxu0 0.0
        %1092 = vmatpush1.msra.mxu0 0.0
        %1093 = vmatprep.subr.mxu0 0.0
        %1094 = vmatpush1.msra.mxu0 0.0
        %1095 = vmatprep.subr.mxu0 0.0
        %1096 = vmatpush1.msra.mxu0 0.0
        %1097 = vmatprep.subr.mxu0 0.0
        %1098 = vmatpush1.msra.mxu0 0.0
        %1099 = vmatprep.subr.mxu0 0.0
        %1100 = vmatpush1.msra.mxu0 0.0
        %1101 = vmatprep.subr.mxu0 0.0
        %1102 = vmatpush1.msra.mxu0 0.0
        %1103 = vmatprep.subr.mxu0 0.0
        %1104 = vmatpush1.msra.mxu0 0.0
        %1105 = vmatprep.subr.mxu0 0.0
        %1106 = vmatpush1.msra.mxu0 0.0
        %1107 = vmatprep.subr.mxu0 0.0
        %1108 = vmatpush1.msra.mxu0 0.0
        %1109 = vmatprep.subr.mxu0 0.0
        %1110 = vmatpush1.msra.mxu0 0.0
        %1111 = vmatprep.subr.mxu0 0.0
        %1112 = vmatpush1.msra.mxu0 0.0
        %1113 = vmatprep.subr.mxu0 0.0
        %1114 = vmatpush1.msra.mxu0 0.0
        %1115 = vmatprep.subr.mxu0 0.0
        %1116 = vmatpush1.msra.mxu0 0.0
        %1117 = vmatprep.subr.mxu0 0.0
        %1118 = vmatpush1.msra.mxu0 0.0
        %1119 = vmatprep.subr.mxu0 0.0
        %1120 = vmatpush1.msra.mxu0 0.0
        %1121 = vmatprep.subr.mxu0 0.0
        %1122 = vmatpush1.msra.mxu0 0.0
        %1123 = vmatprep.subr.mxu0 0.0
        %1124 = vmatpush1.msra.mxu0 0.0
        %1125 = vmatprep.subr.mxu0 0.0
        %1126 = vmatpush1.msra.mxu0 0.0
        %1127 = vmatprep.subr.mxu0 0.0
        %1128 = vmatpush1.msra.mxu0 0.0
        %1129 = vmatprep.subr.mxu0 0.0
        %1130 = vmatpush1.msra.mxu0 0.0
        %1131 = vmatprep.subr.mxu0 0.0
        %1132 = vmatpush1.msra.mxu0 0.0
        %1133 = vmatprep.subr.mxu0 0.0
        %1134 = vmatpush1.msra.mxu0 0.0
        %1135 = vmatprep.subr.mxu0 0.0
        %1136 = vmatpush1.msra.mxu0 0.0
        %1137 = vmatprep.mubr.f32.mxu0 0.0
        %1138 = vmatmul.mubr.f32.gmra.mrb[0].mxu0 %v1071
        %v1139 = vpop.f32.mrb[0].mxu0
        %v1140 = vadd.f32 %v1067, %v1139
        %v1141 = vpop.f32.mrb[0].mxu0
        %1142 = vdwg.mxu0
        %v1143 = vld [vmem:[%s922] sm:$0xff]
        %v1144 = vld [vmem:[%s922 + $0x8] sm:$0xff]
        %v1145 = vld [vmem:[%s922 + $0x10] sm:$0xff]
        %v1146 = vld [vmem:[%s922 + $0x18] sm:$0xff]
        %v1147 = vld [vmem:[%s925] sm:$0x1]
        %v1149 = vlaneseq
        %v1150 = vshrl.u32 %v1149, 7
        %v1151 = vsub.s32 0, %v1150
        %v1152 = vrot.slane %v1147, %v1151
        %1154 = vmatprep.subr.mxu0 0.0
        %1155 = vmatpush1.msra.mxu0 %v1143
        %1156 = vmatprep.subr.mxu0 0.0
        %1157 = vmatpush1.msra.mxu0 %v1144
        %1158 = vmatprep.subr.mxu0 0.0
        %1159 = vmatpush1.msra.mxu0 %v1145
        %1160 = vmatprep.subr.mxu0 0.0
        %1161 = vmatpush1.msra.mxu0 %v1146
        %1162 = vmatprep.subr.mxu0 0.0
        %1163 = vmatpush1.msra.mxu0 0.0
        %1164 = vmatprep.subr.mxu0 0.0
        %1165 = vmatpush1.msra.mxu0 0.0
        %1166 = vmatprep.subr.mxu0 0.0
        %1167 = vmatpush1.msra.mxu0 0.0
        %1168 = vmatprep.subr.mxu0 0.0
        %1169 = vmatpush1.msra.mxu0 0.0
        %1170 = vmatprep.subr.mxu0 0.0
        %1171 = vmatpush1.msra.mxu0 0.0
        %1172 = vmatprep.subr.mxu0 0.0
        %1173 = vmatpush1.msra.mxu0 0.0
        %1174 = vmatprep.subr.mxu0 0.0
        %1175 = vmatpush1.msra.mxu0 0.0
        %1176 = vmatprep.subr.mxu0 0.0
        %1177 = vmatpush1.msra.mxu0 0.0
        %1178 = vmatprep.subr.mxu0 0.0
        %1179 = vmatpush1.msra.mxu0 0.0
        %1180 = vmatprep.subr.mxu0 0.0
        %1181 = vmatpush1.msra.mxu0 0.0
        %1182 = vmatprep.subr.mxu0 0.0
        %1183 = vmatpush1.msra.mxu0 0.0
        %1184 = vmatprep.subr.mxu0 0.0
        %1185 = vmatpush1.msra.mxu0 0.0
        %1186 = vmatprep.subr.mxu0 0.0
        %1187 = vmatpush1.msra.mxu0 0.0
        %1188 = vmatprep.subr.mxu0 0.0
        %1189 = vmatpush1.msra.mxu0 0.0
        %1190 = vmatprep.subr.mxu0 0.0
        %1191 = vmatpush1.msra.mxu0 0.0
        %1192 = vmatprep.subr.mxu0 0.0
        %1193 = vmatpush1.msra.mxu0 0.0
        %1194 = vmatprep.subr.mxu0 0.0
        %1195 = vmatpush1.msra.mxu0 0.0
        %1196 = vmatprep.subr.mxu0 0.0
        %1197 = vmatpush1.msra.mxu0 0.0
        %1198 = vmatprep.subr.mxu0 0.0
        %1199 = vmatpush1.msra.mxu0 0.0
        %1200 = vmatprep.subr.mxu0 0.0
        %1201 = vmatpush1.msra.mxu0 0.0
        %1202 = vmatprep.subr.mxu0 0.0
        %1203 = vmatpush1.msra.mxu0 0.0
        %1204 = vmatprep.subr.mxu0 0.0
        %1205 = vmatpush1.msra.mxu0 0.0
        %1206 = vmatprep.subr.mxu0 0.0
        %1207 = vmatpush1.msra.mxu0 0.0
        %1208 = vmatprep.subr.mxu0 0.0
        %1209 = vmatpush1.msra.mxu0 0.0
        %1210 = vmatprep.subr.mxu0 0.0
        %1211 = vmatpush1.msra.mxu0 0.0
        %1212 = vmatprep.subr.mxu0 0.0
        %1213 = vmatpush1.msra.mxu0 0.0
        %1214 = vmatprep.subr.mxu0 0.0
        %1215 = vmatpush1.msra.mxu0 0.0
        %1216 = vmatprep.subr.mxu0 0.0
        %1217 = vmatpush1.msra.mxu0 0.0
        %1218 = vmatprep.mubr.f32.mxu0 0.0
        %1219 = vmatmul.mubr.f32.gmra.mrb[0].mxu0 %v1071
        %v1220 = vpop.f32.mrb[0].mxu0
        %v1221 = vadd.f32 %v1152, %v1220
        %v1222 = vpop.f32.mrb[0].mxu0
        %1223 = vdwg.mxu0
        %v1224 = vld [vmem:[%s930] sm:$0xff]
        %v1225 = vld [vmem:[%s930 + $0x8] sm:$0xff]
        %v1226 = vld [vmem:[%s930 + $0x10] sm:$0xff]
        %v1227 = vld [vmem:[%s930 + $0x18] sm:$0xff]
        %v1228 = vld [vmem:[%s933] sm:$0x1]
        %v1230 = vlaneseq
        %v1231 = vshrl.u32 %v1230, 7
        %v1232 = vsub.s32 0, %v1231
        %v1233 = vrot.slane %v1228, %v1232
        %1235 = vmatprep.subr.mxu0 0.0
        %1236 = vmatpush1.msra.mxu0 %v1224
        %1237 = vmatprep.subr.mxu0 0.0
        %1238 = vmatpush1.msra.mxu0 %v1225
        %1239 = vmatprep.subr.mxu0 0.0
        %1240 = vmatpush1.msra.mxu0 %v1226
        %1241 = vmatprep.subr.mxu0 0.0
        %1242 = vmatpush1.msra.mxu0 %v1227
        %1243 = vmatprep.subr.mxu0 0.0
        %1244 = vmatpush1.msra.mxu0 0.0
        %1245 = vmatprep.subr.mxu0 0.0
        %1246 = vmatpush1.msra.mxu0 0.0
        %1247 = vmatprep.subr.mxu0 0.0
        %1248 = vmatpush1.msra.mxu0 0.0
        %1249 = vmatprep.subr.mxu0 0.0
        %1250 = vmatpush1.msra.mxu0 0.0
        %1251 = vmatprep.subr.mxu0 0.0
        %1252 = vmatpush1.msra.mxu0 0.0
        %1253 = vmatprep.subr.mxu0 0.0
        %1254 = vmatpush1.msra.mxu0 0.0
        %1255 = vmatprep.subr.mxu0 0.0
        %1256 = vmatpush1.msra.mxu0 0.0
        %1257 = vmatprep.subr.mxu0 0.0
        %1258 = vmatpush1.msra.mxu0 0.0
        %1259 = vmatprep.subr.mxu0 0.0
        %1260 = vmatpush1.msra.mxu0 0.0
        %1261 = vmatprep.subr.mxu0 0.0
        %1262 = vmatpush1.msra.mxu0 0.0
        %1263 = vmatprep.subr.mxu0 0.0
        %1264 = vmatpush1.msra.mxu0 0.0
        %1265 = vmatprep.subr.mxu0 0.0
        %1266 = vmatpush1.msra.mxu0 0.0
        %1267 = vmatprep.subr.mxu0 0.0
        %1268 = vmatpush1.msra.mxu0 0.0
        %1269 = vmatprep.subr.mxu0 0.0
        %1270 = vmatpush1.msra.mxu0 0.0
        %1271 = vmatprep.subr.mxu0 0.0
        %1272 = vmatpush1.msra.mxu0 0.0
        %1273 = vmatprep.subr.mxu0 0.0
        %1274 = vmatpush1.msra.mxu0 0.0
        %1275 = vmatprep.subr.mxu0 0.0
        %1276 = vmatpush1.msra.mxu0 0.0
        %1277 = vmatprep.subr.mxu0 0.0
        %1278 = vmatpush1.msra.mxu0 0.0
        %1279 = vmatprep.subr.mxu0 0.0
        %1280 = vmatpush1.msra.mxu0 0.0
        %1281 = vmatprep.subr.mxu0 0.0
        %1282 = vmatpush1.msra.mxu0 0.0
        %1283 = vmatprep.subr.mxu0 0.0
        %1284 = vmatpush1.msra.mxu0 0.0
        %1285 = vmatprep.subr.mxu0 0.0
        %1286 = vmatpush1.msra.mxu0 0.0
        %1287 = vmatprep.subr.mxu0 0.0
        %1288 = vmatpush1.msra.mxu0 0.0
        %1289 = vmatprep.subr.mxu0 0.0
        %1290 = vmatpush1.msra.mxu0 0.0
        %1291 = vmatprep.subr.mxu0 0.0
        %1292 = vmatpush1.msra.mxu0 0.0
        %1293 = vmatprep.subr.mxu0 0.0
        %1294 = vmatpush1.msra.mxu0 0.0
        %1295 = vmatprep.subr.mxu0 0.0
        %1296 = vmatpush1.msra.mxu0 0.0
        %1297 = vmatprep.subr.mxu0 0.0
        %1298 = vmatpush1.msra.mxu0 0.0
        %1299 = vmatprep.mubr.f32.mxu0 0.0
        %1300 = vmatmul.mubr.f32.gmra.mrb[0].mxu0 %v1071
        %v1301 = vpop.f32.mrb[0].mxu0
        %v1302 = vadd.f32 %v1233, %v1301
        %v1303 = vpop.f32.mrb[0].mxu0
        %1304 = vdwg.mxu0
        %vm1305 = vcmask 64512
        %v1307 = vsel %vm1305, %v1140, 0
        %v1310 = vsel %vm1305, %v1221, 0
        %1312 = vmatprep.subr.mxu0 0.0
        %1313 = vmatpush1.xpose.msra.mxu0 %v1310
        %1314 = vmatprep.subr.mxu0 0.0
        %1315 = vmatpush1.xpose.msra.mxu0 0.0
        %1316 = vmatprep.subr.mxu0 0.0
        %1317 = vmatpush1.xpose.msra.mxu0 0.0
        %1318 = vmatprep.subr.mxu0 0.0
        %1319 = vmatpush1.xpose.msra.mxu0 0.0
        %1320 = vmatprep.subr.mxu0 0.0
        %1321 = vmatpush1.xpose.msra.mxu0 0.0
        %1322 = vmatprep.subr.mxu0 0.0
        %1323 = vmatpush1.xpose.msra.mxu0 0.0
        %1324 = vmatprep.subr.mxu0 0.0
        %1325 = vmatpush1.xpose.msra.mxu0 0.0
        %1326 = vmatprep.subr.mxu0 0.0
        %1327 = vmatpush1.xpose.msra.mxu0 0.0
        %1328 = vmatprep.subr.mxu0 0.0
        %1329 = vmatpush1.xpose.msra.mxu0 0.0
        %1330 = vmatprep.subr.mxu0 0.0
        %1331 = vmatpush1.xpose.msra.mxu0 0.0
        %1332 = vmatprep.subr.mxu0 0.0
        %1333 = vmatpush1.xpose.msra.mxu0 0.0
        %1334 = vmatprep.subr.mxu0 0.0
        %1335 = vmatpush1.xpose.msra.mxu0 0.0
        %1336 = vmatprep.subr.mxu0 0.0
        %1337 = vmatpush1.xpose.msra.mxu0 0.0
        %1338 = vmatprep.subr.mxu0 0.0
        %1339 = vmatpush1.xpose.msra.mxu0 0.0
        %1340 = vmatprep.subr.mxu0 0.0
        %1341 = vmatpush1.xpose.msra.mxu0 0.0
        %1342 = vmatprep.subr.mxu0 0.0
        %1343 = vmatpush1.xpose.msra.mxu0 0.0
        %1344 = vmatprep.subr.mxu0 0.0
        %1345 = vmatpush1.xpose.msra.mxu0 0.0
        %1346 = vmatprep.subr.mxu0 0.0
        %1347 = vmatpush1.xpose.msra.mxu0 0.0
        %1348 = vmatprep.subr.mxu0 0.0
        %1349 = vmatpush1.xpose.msra.mxu0 0.0
        %1350 = vmatprep.subr.mxu0 0.0
        %1351 = vmatpush1.xpose.msra.mxu0 0.0
        %1352 = vmatprep.subr.mxu0 0.0
        %1353 = vmatpush1.xpose.msra.mxu0 0.0
        %1354 = vmatprep.subr.mxu0 0.0
        %1355 = vmatpush1.xpose.msra.mxu0 0.0
        %1356 = vmatprep.subr.mxu0 0.0
        %1357 = vmatpush1.xpose.msra.mxu0 0.0
        %1358 = vmatprep.subr.mxu0 0.0
        %1359 = vmatpush1.xpose.msra.mxu0 0.0
        %1360 = vmatprep.subr.mxu0 0.0
        %1361 = vmatpush1.xpose.msra.mxu0 0.0
        %1362 = vmatprep.subr.mxu0 0.0
        %1363 = vmatpush1.xpose.msra.mxu0 0.0
        %1364 = vmatprep.subr.mxu0 0.0
        %1365 = vmatpush1.xpose.msra.mxu0 0.0
        %1366 = vmatprep.subr.mxu0 0.0
        %1367 = vmatpush1.xpose.msra.mxu0 0.0
        %1368 = vmatprep.subr.mxu0 0.0
        %1369 = vmatpush1.xpose.msra.mxu0 0.0
        %1370 = vmatprep.subr.mxu0 0.0
        %1371 = vmatpush1.xpose.msra.mxu0 0.0
        %1372 = vmatprep.subr.mxu0 0.0
        %1373 = vmatpush1.xpose.msra.mxu0 0.0
        %1374 = vmatprep.subr.mxu0 0.0
        %1375 = vmatpush1.xpose.msra.mxu0 0.0
        %1376 = vmatprep.mubr.f32.mxu0 0.0
        %1377 = vmatmul.mubr.f32.gmra.mrb[0].mxu0 %v1307
        %v1378 = vpop.f32.mrb[0].mxu0
        %v1379 = vadd.f32 0.0, %v1378
        %v1380 = vpop.f32.mrb[0].mxu0
        %1381 = vdwg.mxu0
        %v1382 = vsel %vm1305, %v1379, -inf
        %1383 = vmax.xlane.f32.xlu0 %v1382
        %v1384 = vpop.xlane.xlu0 %1383
        %v1385 = vsub.f32 %v1379, %v1384
        %v1386 = vmul.f32 %v1385, 1.442695
        %v1387 = vpow.pop %v1386
        %v1388 = vsel %vm1305, %v1387, 0.0
        %1389 = vadd.xlane.f32.xlu0 %v1388
        %v1390 = vpop.xlane.xlu0 %1389
        %v1391 = vrcp.pop %v1390
        %v1392 = vmul.f32 %v1387, %v1391
        %v1394 = vsel %vm1305, %v1392, 0
        %1396 = vmatprep.subr.mxu0 0.0
        %1397 = vmatpush1.msra.mxu0 %v1302
        %1398 = vmatprep.subr.mxu0 0.0
        %1399 = vmatpush1.msra.mxu0 0.0
        %1400 = vmatprep.subr.mxu0 0.0
        %1401 = vmatpush1.msra.mxu0 0.0
        %1402 = vmatprep.subr.mxu0 0.0
        %1403 = vmatpush1.msra.mxu0 0.0
        %1404 = vmatprep.subr.mxu0 0.0
        %1405 = vmatpush1.msra.mxu0 0.0
        %1406 = vmatprep.subr.mxu0 0.0
        %1407 = vmatpush1.msra.mxu0 0.0
        %1408 = vmatprep.subr.mxu0 0.0
        %1409 = vmatpush1.msra.mxu0 0.0
        %1410 = vmatprep.subr.mxu0 0.0
        %1411 = vmatpush1.msra.mxu0 0.0
        %1412 = vmatprep.subr.mxu0 0.0
        %1413 = vmatpush1.msra.mxu0 0.0
        %1414 = vmatprep.subr.mxu0 0.0
        %1415 = vmatpush1.msra.mxu0 0.0
        %1416 = vmatprep.subr.mxu0 0.0
        %1417 = vmatpush1.msra.mxu0 0.0
        %1418 = vmatprep.subr.mxu0 0.0
        %1419 = vmatpush1.msra.mxu0 0.0
        %1420 = vmatprep.subr.mxu0 0.0
        %1421 = vmatpush1.msra.mxu0 0.0
        %1422 = vmatprep.subr.mxu0 0.0
        %1423 = vmatpush1.msra.mxu0 0.0
        %1424 = vmatprep.subr.mxu0 0.0
        %1425 = vmatpush1.msra.mxu0 0.0
        %1426 = vmatprep.subr.mxu0 0.0
        %1427 = vmatpush1.msra.mxu0 0.0
        %1428 = vmatprep.subr.mxu0 0.0
        %1429 = vmatpush1.msra.mxu0 0.0
        %1430 = vmatprep.subr.mxu0 0.0
        %1431 = vmatpush1.msra.mxu0 0.0
        %1432 = vmatprep.subr.mxu0 0.0
        %1433 = vmatpush1.msra.mxu0 0.0
        %1434 = vmatprep.subr.mxu0 0.0
        %1435 = vmatpush1.msra.mxu0 0.0
        %1436 = vmatprep.subr.mxu0 0.0
        %1437 = vmatpush1.msra.mxu0 0.0
        %1438 = vmatprep.subr.mxu0 0.0
        %1439 = vmatpush1.msra.mxu0 0.0
        %1440 = vmatprep.subr.mxu0 0.0
        %1441 = vmatpush1.msra.mxu0 0.0
        %1442 = vmatprep.subr.mxu0 0.0
        %1443 = vmatpush1.msra.mxu0 0.0
        %1444 = vmatprep.subr.mxu0 0.0
        %1445 = vmatpush1.msra.mxu0 0.0
        %1446 = vmatprep.subr.mxu0 0.0
        %1447 = vmatpush1.msra.mxu0 0.0
        %1448 = vmatprep.subr.mxu0 0.0
        %1449 = vmatpush1.msra.mxu0 0.0
        %1450 = vmatprep.subr.mxu0 0.0
        %1451 = vmatpush1.msra.mxu0 0.0
        %1452 = vmatprep.subr.mxu0 0.0
        %1453 = vmatpush1.msra.mxu0 0.0
        %1454 = vmatprep.subr.mxu0 0.0
        %1455 = vmatpush1.msra.mxu0 0.0
        %1456 = vmatprep.subr.mxu0 0.0
        %1457 = vmatpush1.msra.mxu0 0.0
        %1458 = vmatprep.subr.mxu0 0.0
        %1459 = vmatpush1.msra.mxu0 0.0
        %1460 = vmatprep.mubr.f32.mxu0 0.0
        %1461 = vmatmul.mubr.f32.gmra.mrb[0].mxu0 %v1394
        %v1462 = vpop.f32.mrb[0].mxu0
        %v1463 = vadd.f32 0.0, %v1462
        %v1464 = vpop.f32.mrb[0].mxu0
        %1465 = vdwg.mxu0
        %1466 = vrot.lane.b32.xlu0 %v1140, 120
        %v1467 = vpop.permute.xlu0 %1466
        %1468 = vrot.lane.b32.xlu0 %v1221, 120
        %v1469 = vpop.permute.xlu0 %1468
        %v1470 = vsel %vm1305, %v1467, 0
        %v1472 = vsel %vm1305, %v1469, 0
        %1474 = vmatprep.subr.mxu0 0.0
        %1475 = vmatpush1.xpose.msra.mxu0 %v1472
        %1476 = vmatprep.subr.mxu0 0.0
        %1477 = vmatpush1.xpose.msra.mxu0 0.0
        %1478 = vmatprep.subr.mxu0 0.0
        %1479 = vmatpush1.xpose.msra.mxu0 0.0
        %1480 = vmatprep.subr.mxu0 0.0
        %1481 = vmatpush1.xpose.msra.mxu0 0.0
        %1482 = vmatprep.subr.mxu0 0.0
        %1483 = vmatpush1.xpose.msra.mxu0 0.0
        %1484 = vmatprep.subr.mxu0 0.0
        %1485 = vmatpush1.xpose.msra.mxu0 0.0
        %1486 = vmatprep.subr.mxu0 0.0
        %1487 = vmatpush1.xpose.msra.mxu0 0.0
        %1488 = vmatprep.subr.mxu0 0.0
        %1489 = vmatpush1.xpose.msra.mxu0 0.0
        %1490 = vmatprep.subr.mxu0 0.0
        %1491 = vmatpush1.xpose.msra.mxu0 0.0
        %1492 = vmatprep.subr.mxu0 0.0
        %1493 = vmatpush1.xpose.msra.mxu0 0.0
        %1494 = vmatprep.subr.mxu0 0.0
        %1495 = vmatpush1.xpose.msra.mxu0 0.0
        %1496 = vmatprep.subr.mxu0 0.0
        %1497 = vmatpush1.xpose.msra.mxu0 0.0
        %1498 = vmatprep.subr.mxu0 0.0
        %1499 = vmatpush1.xpose.msra.mxu0 0.0
        %1500 = vmatprep.subr.mxu0 0.0
        %1501 = vmatpush1.xpose.msra.mxu0 0.0
        %1502 = vmatprep.subr.mxu0 0.0
        %1503 = vmatpush1.xpose.msra.mxu0 0.0
        %1504 = vmatprep.subr.mxu0 0.0
        %1505 = vmatpush1.xpose.msra.mxu0 0.0
        %1506 = vmatprep.subr.mxu0 0.0
        %1507 = vmatpush1.xpose.msra.mxu0 0.0
        %1508 = vmatprep.subr.mxu0 0.0
        %1509 = vmatpush1.xpose.msra.mxu0 0.0
        %1510 = vmatprep.subr.mxu0 0.0
        %1511 = vmatpush1.xpose.msra.mxu0 0.0
        %1512 = vmatprep.subr.mxu0 0.0
        %1513 = vmatpush1.xpose.msra.mxu0 0.0
        %1514 = vmatprep.subr.mxu0 0.0
        %1515 = vmatpush1.xpose.msra.mxu0 0.0
        %1516 = vmatprep.subr.mxu0 0.0
        %1517 = vmatpush1.xpose.msra.mxu0 0.0
        %1518 = vmatprep.subr.mxu0 0.0
        %1519 = vmatpush1.xpose.msra.mxu0 0.0
        %1520 = vmatprep.subr.mxu0 0.0
        %1521 = vmatpush1.xpose.msra.mxu0 0.0
        %1522 = vmatprep.subr.mxu0 0.0
        %1523 = vmatpush1.xpose.msra.mxu0 0.0
        %1524 = vmatprep.subr.mxu0 0.0
        %1525 = vmatpush1.xpose.msra.mxu0 0.0
        %1526 = vmatprep.subr.mxu0 0.0
        %1527 = vmatpush1.xpose.msra.mxu0 0.0
        %1528 = vmatprep.subr.mxu0 0.0
        %1529 = vmatpush1.xpose.msra.mxu0 0.0
        %1530 = vmatprep.subr.mxu0 0.0
        %1531 = vmatpush1.xpose.msra.mxu0 0.0
        %1532 = vmatprep.subr.mxu0 0.0
        %1533 = vmatpush1.xpose.msra.mxu0 0.0
        %1534 = vmatprep.subr.mxu0 0.0
        %1535 = vmatpush1.xpose.msra.mxu0 0.0
        %1536 = vmatprep.subr.mxu0 0.0
        %1537 = vmatpush1.xpose.msra.mxu0 0.0
        %1538 = vmatprep.mubr.f32.mxu0 0.0
        %1539 = vmatmul.mubr.f32.gmra.mrb[0].mxu0 %v1470
        %v1540 = vpop.f32.mrb[0].mxu0
        %v1541 = vadd.f32 0.0, %v1540
        %v1542 = vpop.f32.mrb[0].mxu0
        %1543 = vdwg.mxu0
        %v1544 = vsel %vm1305, %v1541, -inf
        %1545 = vmax.xlane.f32.xlu0 %v1544
        %v1546 = vpop.xlane.xlu0 %1545
        %v1547 = vsub.f32 %v1541, %v1546
        %v1548 = vmul.f32 %v1547, 1.442695
        %v1549 = vpow.pop %v1548
        %v1550 = vsel %vm1305, %v1549, 0.0
        %1551 = vadd.xlane.f32.xlu0 %v1550
        %v1552 = vpop.xlane.xlu0 %1551
        %v1553 = vrcp.pop %v1552
        %v1554 = vmul.f32 %v1549, %v1553
        %1556 = vrot.lane.b32.xlu0 %v1302, 120
        %v1557 = vpop.permute.xlu0 %1556
        %v1560 = vsel %vm1305, %v1554, 0
        %1562 = vmatprep.subr.mxu0 0.0
        %1563 = vmatpush1.msra.mxu0 %v1557
        %1564 = vmatprep.subr.mxu0 0.0
        %1565 = vmatpush1.msra.mxu0 0.0
        %1566 = vmatprep.subr.mxu0 0.0
        %1567 = vmatpush1.msra.mxu0 0.0
        %1568 = vmatprep.subr.mxu0 0.0
        %1569 = vmatpush1.msra.mxu0 0.0
        %1570 = vmatprep.subr.mxu0 0.0
        %1571 = vmatpush1.msra.mxu0 0.0
        %1572 = vmatprep.subr.mxu0 0.0
        %1573 = vmatpush1.msra.mxu0 0.0
        %1574 = vmatprep.subr.mxu0 0.0
        %1575 = vmatpush1.msra.mxu0 0.0
        %1576 = vmatprep.subr.mxu0 0.0
        %1577 = vmatpush1.msra.mxu0 0.0
        %1578 = vmatprep.subr.mxu0 0.0
        %1579 = vmatpush1.msra.mxu0 0.0
        %1580 = vmatprep.subr.mxu0 0.0
        %1581 = vmatpush1.msra.mxu0 0.0
        %1582 = vmatprep.subr.mxu0 0.0
        %1583 = vmatpush1.msra.mxu0 0.0
        %1584 = vmatprep.subr.mxu0 0.0
        %1585 = vmatpush1.msra.mxu0 0.0
        %1586 = vmatprep.subr.mxu0 0.0
        %1587 = vmatpush1.msra.mxu0 0.0
        %1588 = vmatprep.subr.mxu0 0.0
        %1589 = vmatpush1.msra.mxu0 0.0
        %1590 = vmatprep.subr.mxu0 0.0
        %1591 = vmatpush1.msra.mxu0 0.0
        %1592 = vmatprep.subr.mxu0 0.0
        %1593 = vmatpush1.msra.mxu0 0.0
        %1594 = vmatprep.subr.mxu0 0.0
        %1595 = vmatpush1.msra.mxu0 0.0
        %1596 = vmatprep.subr.mxu0 0.0
        %1597 = vmatpush1.msra.mxu0 0.0
        %1598 = vmatprep.subr.mxu0 0.0
        %1599 = vmatpush1.msra.mxu0 0.0
        %1600 = vmatprep.subr.mxu0 0.0
        %1601 = vmatpush1.msra.mxu0 0.0
        %1602 = vmatprep.subr.mxu0 0.0
        %1603 = vmatpush1.msra.mxu0 0.0
        %1604 = vmatprep.subr.mxu0 0.0
        %1605 = vmatpush1.msra.mxu0 0.0
        %1606 = vmatprep.subr.mxu0 0.0
        %1607 = vmatpush1.msra.mxu0 0.0
        %1608 = vmatprep.subr.mxu0 0.0
        %1609 = vmatpush1.msra.mxu0 0.0
        %1610 = vmatprep.subr.mxu0 0.0
        %1611 = vmatpush1.msra.mxu0 0.0
        %1612 = vmatprep.subr.mxu0 0.0
        %1613 = vmatpush1.msra.mxu0 0.0
        %1614 = vmatprep.subr.mxu0 0.0
        %1615 = vmatpush1.msra.mxu0 0.0
        %1616 = vmatprep.subr.mxu0 0.0
        %1617 = vmatpush1.msra.mxu0 0.0
        %1618 = vmatprep.subr.mxu0 0.0
        %1619 = vmatpush1.msra.mxu0 0.0
        %1620 = vmatprep.subr.mxu0 0.0
        %1621 = vmatpush1.msra.mxu0 0.0
        %1622 = vmatprep.subr.mxu0 0.0
        %1623 = vmatpush1.msra.mxu0 0.0
        %1624 = vmatprep.subr.mxu0 0.0
        %1625 = vmatpush1.msra.mxu0 0.0
        %1626 = vmatprep.mubr.f32.mxu0 0.0
        %1627 = vmatmul.mubr.f32.gmra.mrb[0].mxu0 %v1560
        %v1628 = vpop.f32.mrb[0].mxu0
        %v1629 = vadd.f32 0.0, %v1628
        %v1630 = vpop.f32.mrb[0].mxu0
        %1631 = vdwg.mxu0
        %1632 = vrot.lane.b32.xlu0 %v1140, 112
        %v1633 = vpop.permute.xlu0 %1632
        %1634 = vrot.lane.b32.xlu0 %v1221, 112
        %v1635 = vpop.permute.xlu0 %1634
        %v1636 = vsel %vm1305, %v1633, 0
        %v1638 = vsel %vm1305, %v1635, 0
        %1640 = vmatprep.subr.mxu0 0.0
        %1641 = vmatpush1.xpose.msra.mxu0 %v1638
        %1642 = vmatprep.subr.mxu0 0.0
        %1643 = vmatpush1.xpose.msra.mxu0 0.0
        %1644 = vmatprep.subr.mxu0 0.0
        %1645 = vmatpush1.xpose.msra.mxu0 0.0
        %1646 = vmatprep.subr.mxu0 0.0
        %1647 = vmatpush1.xpose.msra.mxu0 0.0
        %1648 = vmatprep.subr.mxu0 0.0
        %1649 = vmatpush1.xpose.msra.mxu0 0.0
        %1650 = vmatprep.subr.mxu0 0.0
        %1651 = vmatpush1.xpose.msra.mxu0 0.0
        %1652 = vmatprep.subr.mxu0 0.0
        %1653 = vmatpush1.xpose.msra.mxu0 0.0
        %1654 = vmatprep.subr.mxu0 0.0
        %1655 = vmatpush1.xpose.msra.mxu0 0.0
        %1656 = vmatprep.subr.mxu0 0.0
        %1657 = vmatpush1.xpose.msra.mxu0 0.0
        %1658 = vmatprep.subr.mxu0 0.0
        %1659 = vmatpush1.xpose.msra.mxu0 0.0
        %1660 = vmatprep.subr.mxu0 0.0
        %1661 = vmatpush1.xpose.msra.mxu0 0.0
        %1662 = vmatprep.subr.mxu0 0.0
        %1663 = vmatpush1.xpose.msra.mxu0 0.0
        %1664 = vmatprep.subr.mxu0 0.0
        %1665 = vmatpush1.xpose.msra.mxu0 0.0
        %1666 = vmatprep.subr.mxu0 0.0
        %1667 = vmatpush1.xpose.msra.mxu0 0.0
        %1668 = vmatprep.subr.mxu0 0.0
        %1669 = vmatpush1.xpose.msra.mxu0 0.0
        %1670 = vmatprep.subr.mxu0 0.0
        %1671 = vmatpush1.xpose.msra.mxu0 0.0
        %1672 = vmatprep.subr.mxu0 0.0
        %1673 = vmatpush1.xpose.msra.mxu0 0.0
        %1674 = vmatprep.subr.mxu0 0.0
        %1675 = vmatpush1.xpose.msra.mxu0 0.0
        %1676 = vmatprep.subr.mxu0 0.0
        %1677 = vmatpush1.xpose.msra.mxu0 0.0
        %1678 = vmatprep.subr.mxu0 0.0
        %1679 = vmatpush1.xpose.msra.mxu0 0.0
        %1680 = vmatprep.subr.mxu0 0.0
        %1681 = vmatpush1.xpose.msra.mxu0 0.0
        %1682 = vmatprep.subr.mxu0 0.0
        %1683 = vmatpush1.xpose.msra.mxu0 0.0
        %1684 = vmatprep.subr.mxu0 0.0
        %1685 = vmatpush1.xpose.msra.mxu0 0.0
        %1686 = vmatprep.subr.mxu0 0.0
        %1687 = vmatpush1.xpose.msra.mxu0 0.0
        %1688 = vmatprep.subr.mxu0 0.0
        %1689 = vmatpush1.xpose.msra.mxu0 0.0
        %1690 = vmatprep.subr.mxu0 0.0
        %1691 = vmatpush1.xpose.msra.mxu0 0.0
        %1692 = vmatprep.subr.mxu0 0.0
        %1693 = vmatpush1.xpose.msra.mxu0 0.0
        %1694 = vmatprep.subr.mxu0 0.0
        %1695 = vmatpush1.xpose.msra.mxu0 0.0
        %1696 = vmatprep.subr.mxu0 0.0
        %1697 = vmatpush1.xpose.msra.mxu0 0.0
        %1698 = vmatprep.subr.mxu0 0.0
        %1699 = vmatpush1.xpose.msra.mxu0 0.0
        %1700 = vmatprep.subr.mxu0 0.0
        %1701 = vmatpush1.xpose.msra.mxu0 0.0
        %1702 = vmatprep.subr.mxu0 0.0
        %1703 = vmatpush1.xpose.msra.mxu0 0.0
        %1704 = vmatprep.mubr.f32.mxu0 0.0
        %1705 = vmatmul.mubr.f32.gmra.mrb[0].mxu0 %v1636
        %v1706 = vpop.f32.mrb[0].mxu0
        %v1707 = vadd.f32 0.0, %v1706
        %v1708 = vpop.f32.mrb[0].mxu0
        %1709 = vdwg.mxu0
        %v1710 = vsel %vm1305, %v1707, -inf
        %1711 = vmax.xlane.f32.xlu0 %v1710
        %v1712 = vpop.xlane.xlu0 %1711
        %v1713 = vsub.f32 %v1707, %v1712
        %v1714 = vmul.f32 %v1713, 1.442695
        %v1715 = vpow.pop %v1714
        %v1716 = vsel %vm1305, %v1715, 0.0
        %1717 = vadd.xlane.f32.xlu0 %v1716
        %v1718 = vpop.xlane.xlu0 %1717
        %v1719 = vrcp.pop %v1718
        %v1720 = vmul.f32 %v1715, %v1719
        %1721 = vrot.lane.b32.xlu0 %v1302, 112
        %v1722 = vpop.permute.xlu0 %1721
        %v1725 = vsel %vm1305, %v1720, 0
        %1727 = vmatprep.subr.mxu0 0.0
        %1728 = vmatpush1.msra.mxu0 %v1722
        %1729 = vmatprep.subr.mxu0 0.0
        %1730 = vmatpush1.msra.mxu0 0.0
        %1731 = vmatprep.subr.mxu0 0.0
        %1732 = vmatpush1.msra.mxu0 0.0
        %1733 = vmatprep.subr.mxu0 0.0
        %1734 = vmatpush1.msra.mxu0 0.0
        %1735 = vmatprep.subr.mxu0 0.0
        %1736 = vmatpush1.msra.mxu0 0.0
        %1737 = vmatprep.subr.mxu0 0.0
        %1738 = vmatpush1.msra.mxu0 0.0
        %1739 = vmatprep.subr.mxu0 0.0
        %1740 = vmatpush1.msra.mxu0 0.0
        %1741 = vmatprep.subr.mxu0 0.0
        %1742 = vmatpush1.msra.mxu0 0.0
        %1743 = vmatprep.subr.mxu0 0.0
        %1744 = vmatpush1.msra.mxu0 0.0
        %1745 = vmatprep.subr.mxu0 0.0
        %1746 = vmatpush1.msra.mxu0 0.0
        %1747 = vmatprep.subr.mxu0 0.0
        %1748 = vmatpush1.msra.mxu0 0.0
        %1749 = vmatprep.subr.mxu0 0.0
        %1750 = vmatpush1.msra.mxu0 0.0
        %1751 = vmatprep.subr.mxu0 0.0
        %1752 = vmatpush1.msra.mxu0 0.0
        %1753 = vmatprep.subr.mxu0 0.0
        %1754 = vmatpush1.msra.mxu0 0.0
        %1755 = vmatprep.subr.mxu0 0.0
        %1756 = vmatpush1.msra.mxu0 0.0
        %1757 = vmatprep.subr.mxu0 0.0
        %1758 = vmatpush1.msra.mxu0 0.0
        %1759 = vmatprep.subr.mxu0 0.0
        %1760 = vmatpush1.msra.mxu0 0.0
        %1761 = vmatprep.subr.mxu0 0.0
        %1762 = vmatpush1.msra.mxu0 0.0
        %1763 = vmatprep.subr.mxu0 0.0
        %1764 = vmatpush1.msra.mxu0 0.0
        %1765 = vmatprep.subr.mxu0 0.0
        %1766 = vmatpush1.msra.mxu0 0.0
        %1767 = vmatprep.subr.mxu0 0.0
        %1768 = vmatpush1.msra.mxu0 0.0
        %1769 = vmatprep.subr.mxu0 0.0
        %1770 = vmatpush1.msra.mxu0 0.0
        %1771 = vmatprep.subr.mxu0 0.0
        %1772 = vmatpush1.msra.mxu0 0.0
        %1773 = vmatprep.subr.mxu0 0.0
        %1774 = vmatpush1.msra.mxu0 0.0
        %1775 = vmatprep.subr.mxu0 0.0
        %1776 = vmatpush1.msra.mxu0 0.0
        %1777 = vmatprep.subr.mxu0 0.0
        %1778 = vmatpush1.msra.mxu0 0.0
        %1779 = vmatprep.subr.mxu0 0.0
        %1780 = vmatpush1.msra.mxu0 0.0
        %1781 = vmatprep.subr.mxu0 0.0
        %1782 = vmatpush1.msra.mxu0 0.0
        %1783 = vmatprep.subr.mxu0 0.0
        %1784 = vmatpush1.msra.mxu0 0.0
        %1785 = vmatprep.subr.mxu0 0.0
        %1786 = vmatpush1.msra.mxu0 0.0
        %1787 = vmatprep.subr.mxu0 0.0
        %1788 = vmatpush1.msra.mxu0 0.0
        %1789 = vmatprep.subr.mxu0 0.0
        %1790 = vmatpush1.msra.mxu0 0.0
        %1791 = vmatprep.mubr.f32.mxu0 0.0
        %1792 = vmatmul.mubr.f32.gmra.mrb[0].mxu0 %v1725
        %v1793 = vpop.f32.mrb[0].mxu0
        %v1794 = vadd.f32 0.0, %v1793
        %v1795 = vpop.f32.mrb[0].mxu0
        %1796 = vdwg.mxu0
        %1797 = vrot.lane.b32.xlu0 %v1140, 104
        %v1798 = vpop.permute.xlu0 %1797
        %1799 = vrot.lane.b32.xlu0 %v1221, 104
        %v1800 = vpop.permute.xlu0 %1799
        %v1801 = vsel %vm1305, %v1798, 0
        %v1803 = vsel %vm1305, %v1800, 0
        %1805 = vmatprep.subr.mxu0 0.0
        %1806 = vmatpush1.xpose.msra.mxu0 %v1803
        %1807 = vmatprep.subr.mxu0 0.0
        %1808 = vmatpush1.xpose.msra.mxu0 0.0
        %1809 = vmatprep.subr.mxu0 0.0
        %1810 = vmatpush1.xpose.msra.mxu0 0.0
        %1811 = vmatprep.subr.mxu0 0.0
        %1812 = vmatpush1.xpose.msra.mxu0 0.0
        %1813 = vmatprep.subr.mxu0 0.0
        %1814 = vmatpush1.xpose.msra.mxu0 0.0
        %1815 = vmatprep.subr.mxu0 0.0
        %1816 = vmatpush1.xpose.msra.mxu0 0.0
        %1817 = vmatprep.subr.mxu0 0.0
        %1818 = vmatpush1.xpose.msra.mxu0 0.0
        %1819 = vmatprep.subr.mxu0 0.0
        %1820 = vmatpush1.xpose.msra.mxu0 0.0
        %1821 = vmatprep.subr.mxu0 0.0
        %1822 = vmatpush1.xpose.msra.mxu0 0.0
        %1823 = vmatprep.subr.mxu0 0.0
        %1824 = vmatpush1.xpose.msra.mxu0 0.0
        %1825 = vmatprep.subr.mxu0 0.0
        %1826 = vmatpush1.xpose.msra.mxu0 0.0
        %1827 = vmatprep.subr.mxu0 0.0
        %1828 = vmatpush1.xpose.msra.mxu0 0.0
        %1829 = vmatprep.subr.mxu0 0.0
        %1830 = vmatpush1.xpose.msra.mxu0 0.0
        %1831 = vmatprep.subr.mxu0 0.0
        %1832 = vmatpush1.xpose.msra.mxu0 0.0
        %1833 = vmatprep.subr.mxu0 0.0
        %1834 = vmatpush1.xpose.msra.mxu0 0.0
        %1835 = vmatprep.subr.mxu0 0.0
        %1836 = vmatpush1.xpose.msra.mxu0 0.0
        %1837 = vmatprep.subr.mxu0 0.0
        %1838 = vmatpush1.xpose.msra.mxu0 0.0
        %1839 = vmatprep.subr.mxu0 0.0
        %1840 = vmatpush1.xpose.msra.mxu0 0.0
        %1841 = vmatprep.subr.mxu0 0.0
        %1842 = vmatpush1.xpose.msra.mxu0 0.0
        %1843 = vmatprep.subr.mxu0 0.0
        %1844 = vmatpush1.xpose.msra.mxu0 0.0
        %1845 = vmatprep.subr.mxu0 0.0
        %1846 = vmatpush1.xpose.msra.mxu0 0.0
        %1847 = vmatprep.subr.mxu0 0.0
        %1848 = vmatpush1.xpose.msra.mxu0 0.0
        %1849 = vmatprep.subr.mxu0 0.0
        %1850 = vmatpush1.xpose.msra.mxu0 0.0
        %1851 = vmatprep.subr.mxu0 0.0
        %1852 = vmatpush1.xpose.msra.mxu0 0.0
        %1853 = vmatprep.subr.mxu0 0.0
        %1854 = vmatpush1.xpose.msra.mxu0 0.0
        %1855 = vmatprep.subr.mxu0 0.0
        %1856 = vmatpush1.xpose.msra.mxu0 0.0
        %1857 = vmatprep.subr.mxu0 0.0
        %1858 = vmatpush1.xpose.msra.mxu0 0.0
        %1859 = vmatprep.subr.mxu0 0.0
        %1860 = vmatpush1.xpose.msra.mxu0 0.0
        %1861 = vmatprep.subr.mxu0 0.0
        %1862 = vmatpush1.xpose.msra.mxu0 0.0
        %1863 = vmatprep.subr.mxu0 0.0
        %1864 = vmatpush1.xpose.msra.mxu0 0.0
        %1865 = vmatprep.subr.mxu0 0.0
        %1866 = vmatpush1.xpose.msra.mxu0 0.0
        %1867 = vmatprep.subr.mxu0 0.0
        %1868 = vmatpush1.xpose.msra.mxu0 0.0
        %1869 = vmatprep.mubr.f32.mxu0 0.0
        %1870 = vmatmul.mubr.f32.gmra.mrb[0].mxu0 %v1801
        %v1871 = vpop.f32.mrb[0].mxu0
        %v1872 = vadd.f32 0.0, %v1871
        %v1873 = vpop.f32.mrb[0].mxu0
        %1874 = vdwg.mxu0
        %v1875 = vsel %vm1305, %v1872, -inf
        %1876 = vmax.xlane.f32.xlu0 %v1875
        %v1877 = vpop.xlane.xlu0 %1876
        %v1878 = vsub.f32 %v1872, %v1877
        %v1879 = vmul.f32 %v1878, 1.442695
        %v1880 = vpow.pop %v1879
        %v1881 = vsel %vm1305, %v1880, 0.0
        %1882 = vadd.xlane.f32.xlu0 %v1881
        %v1883 = vpop.xlane.xlu0 %1882
        %v1884 = vrcp.pop %v1883
        %v1885 = vmul.f32 %v1880, %v1884
        %1886 = vrot.lane.b32.xlu0 %v1302, 104
        %v1887 = vpop.permute.xlu0 %1886
        %v1890 = vsel %vm1305, %v1885, 0
        %1892 = vmatprep.subr.mxu0 0.0
        %1893 = vmatpush1.msra.mxu0 %v1887
        %1894 = vmatprep.subr.mxu0 0.0
        %1895 = vmatpush1.msra.mxu0 0.0
        %1896 = vmatprep.subr.mxu0 0.0
        %1897 = vmatpush1.msra.mxu0 0.0
        %1898 = vmatprep.subr.mxu0 0.0
        %1899 = vmatpush1.msra.mxu0 0.0
        %1900 = vmatprep.subr.mxu0 0.0
        %1901 = vmatpush1.msra.mxu0 0.0
        %1902 = vmatprep.subr.mxu0 0.0
        %1903 = vmatpush1.msra.mxu0 0.0
        %1904 = vmatprep.subr.mxu0 0.0
        %1905 = vmatpush1.msra.mxu0 0.0
        %1906 = vmatprep.subr.mxu0 0.0
        %1907 = vmatpush1.msra.mxu0 0.0
        %1908 = vmatprep.subr.mxu0 0.0
        %1909 = vmatpush1.msra.mxu0 0.0
        %1910 = vmatprep.subr.mxu0 0.0
        %1911 = vmatpush1.msra.mxu0 0.0
        %1912 = vmatprep.subr.mxu0 0.0
        %1913 = vmatpush1.msra.mxu0 0.0
        %1914 = vmatprep.subr.mxu0 0.0
        %1915 = vmatpush1.msra.mxu0 0.0
        %1916 = vmatprep.subr.mxu0 0.0
        %1917 = vmatpush1.msra.mxu0 0.0
        %1918 = vmatprep.subr.mxu0 0.0
        %1919 = vmatpush1.msra.mxu0 0.0
        %1920 = vmatprep.subr.mxu0 0.0
        %1921 = vmatpush1.msra.mxu0 0.0
        %1922 = vmatprep.subr.mxu0 0.0
        %1923 = vmatpush1.msra.mxu0 0.0
        %1924 = vmatprep.subr.mxu0 0.0
        %1925 = vmatpush1.msra.mxu0 0.0
        %1926 = vmatprep.subr.mxu0 0.0
        %1927 = vmatpush1.msra.mxu0 0.0
        %1928 = vmatprep.subr.mxu0 0.0
        %1929 = vmatpush1.msra.mxu0 0.0
        %1930 = vmatprep.subr.mxu0 0.0
        %1931 = vmatpush1.msra.mxu0 0.0
        %1932 = vmatprep.subr.mxu0 0.0
        %1933 = vmatpush1.msra.mxu0 0.0
        %1934 = vmatprep.subr.mxu0 0.0
        %1935 = vmatpush1.msra.mxu0 0.0
        %1936 = vmatprep.subr.mxu0 0.0
        %1937 = vmatpush1.msra.mxu0 0.0
        %1938 = vmatprep.subr.mxu0 0.0
        %1939 = vmatpush1.msra.mxu0 0.0
        %1940 = vmatprep.subr.mxu0 0.0
        %1941 = vmatpush1.msra.mxu0 0.0
        %1942 = vmatprep.subr.mxu0 0.0
        %1943 = vmatpush1.msra.mxu0 0.0
        %1944 = vmatprep.subr.mxu0 0.0
        %1945 = vmatpush1.msra.mxu0 0.0
        %1946 = vmatprep.subr.mxu0 0.0
        %1947 = vmatpush1.msra.mxu0 0.0
        %1948 = vmatprep.subr.mxu0 0.0
        %1949 = vmatpush1.msra.mxu0 0.0
        %1950 = vmatprep.subr.mxu0 0.0
        %1951 = vmatpush1.msra.mxu0 0.0
        %1952 = vmatprep.subr.mxu0 0.0
        %1953 = vmatpush1.msra.mxu0 0.0
        %1954 = vmatprep.subr.mxu0 0.0
        %1955 = vmatpush1.msra.mxu0 0.0
        %1956 = vmatprep.mubr.f32.mxu0 0.0
        %1957 = vmatmul.mubr.f32.gmra.mrb[0].mxu0 %v1890
        %v1958 = vpop.f32.mrb[0].mxu0
        %v1959 = vadd.f32 0.0, %v1958
        %v1960 = vpop.f32.mrb[0].mxu0
        %1961 = vdwg.mxu0
        %1963 = vrot.lane.b32.xlu0 %v1629, 8
        %v1964 = vpop.permute.xlu0 %1963
        %1967 = vrot.lane.b32.xlu0 %v1794, 16
        %v1968 = vpop.permute.xlu0 %1967
        %1971 = vrot.lane.b32.xlu0 %v1959, 24
        %v1972 = vpop.permute.xlu0 %1971
        %v1974 = vsel %vm1305, %v1463, %v1964
        %vm1975 = vcmask 130048
        %v1976 = vsel %vm1975, %v1974, %v1968
        %vm1977 = vcmask 195584
        %v1978 = vsel %vm1977, %v1976, %v1972
        %v1979 = vld [vmem:[%s780] sm:$0xff]
        %v1980 = vld [vmem:[%s780 + $0x8] sm:$0xff]
        %v1981 = vld [vmem:[%s780 + $0x10] sm:$0xff]
        %v1982 = vld [vmem:[%s780 + $0x18] sm:$0xff]
        %v1983 = vld [vmem:[%s936] sm:$0x1]
        %v1985 = vlaneseq
        %v1986 = vshrl.u32 %v1985, 7
        %v1987 = vsub.s32 0, %v1986
        %v1988 = vrot.slane %v1983, %v1987
        %v1991 = vsel %vm1069, %v1978, 0
        %1993 = vmatprep.subr.mxu0 0.0
        %1994 = vmatpush1.msra.mxu0 %v1979
        %1995 = vmatprep.subr.mxu0 0.0
        %1996 = vmatpush1.msra.mxu0 %v1980
        %1997 = vmatprep.subr.mxu0 0.0
        %1998 = vmatpush1.msra.mxu0 %v1981
        %1999 = vmatprep.subr.mxu0 0.0
        %2000 = vmatpush1.msra.mxu0 %v1982
        %2001 = vmatprep.subr.mxu0 0.0
        %2002 = vmatpush1.msra.mxu0 0.0
        %2003 = vmatprep.subr.mxu0 0.0
        %2004 = vmatpush1.msra.mxu0 0.0
        %2005 = vmatprep.subr.mxu0 0.0
        %2006 = vmatpush1.msra.mxu0 0.0
        %2007 = vmatprep.subr.mxu0 0.0
        %2008 = vmatpush1.msra.mxu0 0.0
        %2009 = vmatprep.subr.mxu0 0.0
        %2010 = vmatpush1.msra.mxu0 0.0
        %2011 = vmatprep.subr.mxu0 0.0
        %2012 = vmatpush1.msra.mxu0 0.0
        %2013 = vmatprep.subr.mxu0 0.0
        %2014 = vmatpush1.msra.mxu0 0.0
        %2015 = vmatprep.subr.mxu0 0.0
        %2016 = vmatpush1.msra.mxu0 0.0
        %2017 = vmatprep.subr.mxu0 0.0
        %2018 = vmatpush1.msra.mxu0 0.0
        %2019 = vmatprep.subr.mxu0 0.0
        %2020 = vmatpush1.msra.mxu0 0.0
        %2021 = vmatprep.subr.mxu0 0.0
        %2022 = vmatpush1.msra.mxu0 0.0
        %2023 = vmatprep.subr.mxu0 0.0
        %2024 = vmatpush1.msra.mxu0 0.0
        %2025 = vmatprep.subr.mxu0 0.0
        %2026 = vmatpush1.msra.mxu0 0.0
        %2027 = vmatprep.subr.mxu0 0.0
        %2028 = vmatpush1.msra.mxu0 0.0
        %2029 = vmatprep.subr.mxu0 0.0
        %2030 = vmatpush1.msra.mxu0 0.0
        %2031 = vmatprep.subr.mxu0 0.0
        %2032 = vmatpush1.msra.mxu0 0.0
        %2033 = vmatprep.subr.mxu0 0.0
        %2034 = vmatpush1.msra.mxu0 0.0
        %2035 = vmatprep.subr.mxu0 0.0
        %2036 = vmatpush1.msra.mxu0 0.0
        %2037 = vmatprep.subr.mxu0 0.0
        %2038 = vmatpush1.msra.mxu0 0.0
        %2039 = vmatprep.subr.mxu0 0.0
        %2040 = vmatpush1.msra.mxu0 0.0
        %2041 = vmatprep.subr.mxu0 0.0
        %2042 = vmatpush1.msra.mxu0 0.0
        %2043 = vmatprep.subr.mxu0 0.0
        %2044 = vmatpush1.msra.mxu0 0.0
        %2045 = vmatprep.subr.mxu0 0.0
        %2046 = vmatpush1.msra.mxu0 0.0
        %2047 = vmatprep.subr.mxu0 0.0
        %2048 = vmatpush1.msra.mxu0 0.0
        %2049 = vmatprep.subr.mxu0 0.0
        %2050 = vmatpush1.msra.mxu0 0.0
        %2051 = vmatprep.subr.mxu0 0.0
        %2052 = vmatpush1.msra.mxu0 0.0
        %2053 = vmatprep.subr.mxu0 0.0
        %2054 = vmatpush1.msra.mxu0 0.0
        %2055 = vmatprep.subr.mxu0 0.0
        %2056 = vmatpush1.msra.mxu0 0.0
        %2057 = vmatprep.mubr.f32.mxu0 0.0
        %2058 = vmatmul.mubr.f32.gmra.mrb[0].mxu0 %v1991
        %v2059 = vpop.f32.mrb[0].mxu0
        %v2060 = vadd.f32 %v1988, %v2059
        %v2061 = vpop.f32.mrb[0].mxu0
        %2062 = vdwg.mxu0
        %v2063 = vadd.f32 %v1057, %v2060
        %v2064 = vld [vmem:[%s939] sm:$0x1]
        %v2065 = vld [vmem:[%s942] sm:$0x1]
        %v2066 = vsel %vm1069, %v2063, 0.0
        %2067 = vadd.xlane.f32.xlu0 %v2066
        %v2068 = vpop.xlane.xlu0 %2067
        %v2069 = vrcp.pop 32.0
        %v2070 = vmul.f32 %v2068, %v2069
        %v2071 = vsub.f32 %v2063, %v2070
        %v2072 = vmul.f32 %v2071, %v2071
        %v2073 = vsel %vm1069, %v2072, 0.0
        %2074 = vadd.xlane.f32.xlu0 %v2073
        %v2075 = vpop.xlane.xlu0 %2074
        %v2076 = vmul.f32 %v2075, %v2069
        %v2077 = vadd.f32 %v2076, 1e-05
        %v2078 = vrsqrt.pop %v2077
        %v2079 = vmul.f32 %v2071, %v2078
        %v2081 = vlaneseq
        %v2082 = vshrl.u32 %v2081, 7
        %v2083 = vsub.s32 0, %v2082
        %v2084 = vrot.slane %v2064, %v2083
        %v2086 = vmul.f32 %v2079, %v2084
        %v2088 = vlaneseq
        %v2089 = vshrl.u32 %v2088, 7
        %v2090 = vsub.s32 0, %v2089
        %v2091 = vrot.slane %v2065, %v2090
        %v2093 = vadd.f32 %v2086, %v2091
        %v2094 = vld [vmem:[%s789] sm:$0xff]
        %v2095 = vld [vmem:[%s789 + $0x8] sm:$0xff]
        %v2096 = vld [vmem:[%s789 + $0x10] sm:$0xff]
        %v2097 = vld [vmem:[%s789 + $0x18] sm:$0xff]
        %v2098 = vld [vmem:[%s945] sm:$0x1]
        %v2100 = vlaneseq
        %v2101 = vshrl.u32 %v2100, 7
        %v2102 = vsub.s32 0, %v2101
        %v2103 = vrot.slane %v2098, %v2102
        %v2106 = vsel %vm1069, %v2093, 0
        %2108 = vmatprep.subr.mxu0 0.0
        %2109 = vmatpush1.msra.mxu0 %v2094
        %2110 = vmatprep.subr.mxu0 0.0
        %2111 = vmatpush1.msra.mxu0 %v2095
        %2112 = vmatprep.subr.mxu0 0.0
        %2113 = vmatpush1.msra.mxu0 %v2096
        %2114 = vmatprep.subr.mxu0 0.0
        %2115 = vmatpush1.msra.mxu0 %v2097
        %2116 = vmatprep.subr.mxu0 0.0
        %2117 = vmatpush1.msra.mxu0 0.0
        %2118 = vmatprep.subr.mxu0 0.0
        %2119 = vmatpush1.msra.mxu0 0.0
        %2120 = vmatprep.subr.mxu0 0.0
        %2121 = vmatpush1.msra.mxu0 0.0
        %2122 = vmatprep.subr.mxu0 0.0
        %2123 = vmatpush1.msra.mxu0 0.0
        %2124 = vmatprep.subr.mxu0 0.0
        %2125 = vmatpush1.msra.mxu0 0.0
        %2126 = vmatprep.subr.mxu0 0.0
        %2127 = vmatpush1.msra.mxu0 0.0
        %2128 = vmatprep.subr.mxu0 0.0
        %2129 = vmatpush1.msra.mxu0 0.0
        %2130 = vmatprep.subr.mxu0 0.0
        %2131 = vmatpush1.msra.mxu0 0.0
        %2132 = vmatprep.subr.mxu0 0.0
        %2133 = vmatpush1.msra.mxu0 0.0
        %2134 = vmatprep.subr.mxu0 0.0
        %2135 = vmatpush1.msra.mxu0 0.0
        %2136 = vmatprep.subr.mxu0 0.0
        %2137 = vmatpush1.msra.mxu0 0.0
        %2138 = vmatprep.subr.mxu0 0.0
        %2139 = vmatpush1.msra.mxu0 0.0
        %2140 = vmatprep.subr.mxu0 0.0
        %2141 = vmatpush1.msra.mxu0 0.0
        %2142 = vmatprep.subr.mxu0 0.0
        %2143 = vmatpush1.msra.mxu0 0.0
        %2144 = vmatprep.subr.mxu0 0.0
        %2145 = vmatpush1.msra.mxu0 0.0
        %2146 = vmatprep.subr.mxu0 0.0
        %2147 = vmatpush1.msra.mxu0 0.0
        %2148 = vmatprep.subr.mxu0 0.0
        %2149 = vmatpush1.msra.mxu0 0.0
        %2150 = vmatprep.subr.mxu0 0.0
        %2151 = vmatpush1.msra.mxu0 0.0
        %2152 = vmatprep.subr.mxu0 0.0
        %2153 = vmatpush1.msra.mxu0 0.0
        %2154 = vmatprep.subr.mxu0 0.0
        %2155 = vmatpush1.msra.mxu0 0.0
        %2156 = vmatprep.subr.mxu0 0.0
        %2157 = vmatpush1.msra.mxu0 0.0
        %2158 = vmatprep.subr.mxu0 0.0
        %2159 = vmatpush1.msra.mxu0 0.0
        %2160 = vmatprep.subr.mxu0 0.0
        %2161 = vmatpush1.msra.mxu0 0.0
        %2162 = vmatprep.subr.mxu0 0.0
        %2163 = vmatpush1.msra.mxu0 0.0
        %2164 = vmatprep.subr.mxu0 0.0
        %2165 = vmatpush1.msra.mxu0 0.0
        %2166 = vmatprep.subr.mxu0 0.0
        %2167 = vmatpush1.msra.mxu0 0.0
        %2168 = vmatprep.subr.mxu0 0.0
        %2169 = vmatpush1.msra.mxu0 0.0
        %2170 = vmatprep.subr.mxu0 0.0
        %2171 = vmatpush1.msra.mxu0 0.0
        %2172 = vmatprep.mubr.f32.mxu0 0.0
        %2173 = vmatmul.mubr.f32.gmra.mrb[0].mxu0 %v2106
        %v2174 = vpop.f32.mrb[0].mxu0
        %v2175 = vadd.f32 %v2103, %v2174
        %v2176 = vpop.f32.mrb[0].mxu0
        %2177 = vdwg.mxu0
        %v2178 = vmax.f32 %v2175, 0.0
        %v2179 = vld [vmem:[%s950] sm:$0xff]
        %v2180 = vld [vmem:[%s950 + $0x8] sm:$0xff]
        %v2181 = vld [vmem:[%s950 + $0x10] sm:$0xff]
        %v2182 = vld [vmem:[%s950 + $0x18] sm:$0xff]
        %v2183 = vld [vmem:[%s950 + $0x20] sm:$0xff]
        %v2184 = vld [vmem:[%s950 + $0x28] sm:$0xff]
        %v2185 = vld [vmem:[%s950 + $0x30] sm:$0xff]
        %v2186 = vld [vmem:[%s950 + $0x38] sm:$0xff]
        %v2187 = vld [vmem:[%s953] sm:$0x1]
        %v2189 = vlaneseq
        %v2190 = vshrl.u32 %v2189, 7
        %v2191 = vsub.s32 0, %v2190
        %v2192 = vrot.slane %v2187, %v2191
        %vm2194 = vcmask 523264
        %v2196 = vsel %vm2194, %v2178, 0
        %2198 = vmatprep.subr.mxu0 0.0
        %2199 = vmatpush1.msra.mxu0 %v2179
        %2200 = vmatprep.subr.mxu0 0.0
        %2201 = vmatpush1.msra.mxu0 %v2180
        %2202 = vmatprep.subr.mxu0 0.0
        %2203 = vmatpush1.msra.mxu0 %v2181
        %2204 = vmatprep.subr.mxu0 0.0
        %2205 = vmatpush1.msra.mxu0 %v2182
        %2206 = vmatprep.subr.mxu0 0.0
        %2207 = vmatpush1.msra.mxu0 %v2183
        %2208 = vmatprep.subr.mxu0 0.0
        %2209 = vmatpush1.msra.mxu0 %v2184
        %2210 = vmatprep.subr.mxu0 0.0
        %2211 = vmatpush1.msra.mxu0 %v2185
        %2212 = vmatprep.subr.mxu0 0.0
        %2213 = vmatpush1.msra.mxu0 %v2186
        %2214 = vmatprep.subr.mxu0 0.0
        %2215 = vmatpush1.msra.mxu0 0.0
        %2216 = vmatprep.subr.mxu0 0.0
        %2217 = vmatpush1.msra.mxu0 0.0
        %2218 = vmatprep.subr.mxu0 0.0
        %2219 = vmatpush1.msra.mxu0 0.0
        %2220 = vmatprep.subr.mxu0 0.0
        %2221 = vmatpush1.msra.mxu0 0.0
        %2222 = vmatprep.subr.mxu0 0.0
        %2223 = vmatpush1.msra.mxu0 0.0
        %2224 = vmatprep.subr.mxu0 0.0
        %2225 = vmatpush1.msra.mxu0 0.0
        %2226 = vmatprep.subr.mxu0 0.0
        %2227 = vmatpush1.msra.mxu0 0.0
        %2228 = vmatprep.subr.mxu0 0.0
        %2229 = vmatpush1.msra.mxu0 0.0
        %2230 = vmatprep.subr.mxu0 0.0
        %2231 = vmatpush1.msra.mxu0 0.0
        %2232 = vmatprep.subr.mxu0 0.0
        %2233 = vmatpush1.msra.mxu0 0.0
        %2234 = vmatprep.subr.mxu0 0.0
        %2235 = vmatpush1.msra.mxu0 0.0
        %2236 = vmatprep.subr.mxu0 0.0
        %2237 = vmatpush1.msra.mxu0 0.0
        %2238 = vmatprep.subr.mxu0 0.0
        %2239 = vmatpush1.msra.mxu0 0.0
        %2240 = vmatprep.subr.mxu0 0.0
        %2241 = vmatpush1.msra.mxu0 0.0
        %2242 = vmatprep.subr.mxu0 0.0
        %2243 = vmatpush1.msra.mxu0 0.0
        %2244 = vmatprep.subr.mxu0 0.0
        %2245 = vmatpush1.msra.mxu0 0.0
        %2246 = vmatprep.subr.mxu0 0.0
        %2247 = vmatpush1.msra.mxu0 0.0
        %2248 = vmatprep.subr.mxu0 0.0
        %2249 = vmatpush1.msra.mxu0 0.0
        %2250 = vmatprep.subr.mxu0 0.0
        %2251 = vmatpush1.msra.mxu0 0.0
        %2252 = vmatprep.subr.mxu0 0.0
        %2253 = vmatpush1.msra.mxu0 0.0
        %2254 = vmatprep.subr.mxu0 0.0
        %2255 = vmatpush1.msra.mxu0 0.0
        %2256 = vmatprep.subr.mxu0 0.0
        %2257 = vmatpush1.msra.mxu0 0.0
        %2258 = vmatprep.subr.mxu0 0.0
        %2259 = vmatpush1.msra.mxu0 0.0
        %2260 = vmatprep.subr.mxu0 0.0
        %2261 = vmatpush1.msra.mxu0 0.0
        %2262 = vmatprep.mubr.f32.mxu0 0.0
        %2263 = vmatmul.mubr.f32.gmra.mrb[0].mxu0 %v2196
        %v2264 = vpop.f32.mrb[0].mxu0
        %v2265 = vadd.f32 %v2192, %v2264
        %v2266 = vpop.f32.mrb[0].mxu0
        %2267 = vdwg.mxu0
        %v2268 = vadd.f32 %v2093, %v2265
        %v2269 = vld [vmem:[%s956] sm:$0x1]
        %v2270 = vld [vmem:[%s959] sm:$0x1]
        %v2271 = vsel %vm1069, %v2268, 0.0
        %2272 = vadd.xlane.f32.xlu0 %v2271
        %v2273 = vpop.xlane.xlu0 %2272
        %v2274 = vmul.f32 %v2273, %v2069
        %v2275 = vsub.f32 %v2268, %v2274
        %v2276 = vmul.f32 %v2275, %v2275
        %v2277 = vsel %vm1069, %v2276, 0.0
        %2278 = vadd.xlane.f32.xlu0 %v2277
        %v2279 = vpop.xlane.xlu0 %2278
        %v2280 = vmul.f32 %v2279, %v2069
        %v2281 = vadd.f32 %v2280, 1e-05
        %v2282 = vrsqrt.pop %v2281
        %v2283 = vmul.f32 %v2275, %v2282
        %v2285 = vlaneseq
        %v2286 = vshrl.u32 %v2285, 7
        %v2287 = vsub.s32 0, %v2286
        %v2288 = vrot.slane %v2269, %v2287
        %v2290 = vmul.f32 %v2283, %v2288
        %v2292 = vlaneseq
        %v2293 = vshrl.u32 %v2292, 7
        %v2294 = vsub.s32 0, %v2293
        %v2295 = vrot.slane %v2270, %v2294
        %v2297 = vadd.f32 %v2290, %v2295
        %2298 = vst.msk [vmem:[#allocation2] sm:$0xff] %vm1069, %v2297
        %p2299 = scmp.eq.s32.totalorder %s43, 1
        // Predicated region
        $region117: #{tpu_custom_call.1} parent=103 // pred_check
          %p2300 = pneg %p2299
        $region118: #{tpu_custom_call.1} parent=103 // pred_check_branch
          %2302 = sbr.rel (%p2300) target = $region120
        $region119: #{tpu_custom_call.1} parent=103 // pred_region
          %v2303 = vld [vmem:[%s19] sm:$0xff]
          %v2304 = vld [vmem:[%s19 + $0x8] sm:$0xff]
          %v2305 = vld [vmem:[%s19 + $0x10] sm:$0xff]
          %v2306 = vld [vmem:[%s19 + $0x18] sm:$0xff]
          %v2307 = vld [vmem:[%s20] sm:$0x1]
          %v2309 = vlaneseq
          %v2310 = vshrl.u32 %v2309, 7
          %v2311 = vsub.s32 0, %v2310
          %v2312 = vrot.slane %v2307, %v2311
          %v2315 = vsel %vm1069, %v2297, 0
          %2317 = vmatprep.subr.mxu0 0.0
          %2318 = vmatpush1.msra.mxu0 %v2303
          %2319 = vmatprep.subr.mxu0 0.0
          %2320 = vmatpush1.msra.mxu0 %v2304
          %2321 = vmatprep.subr.mxu0 0.0
          %2322 = vmatpush1.msra.mxu0 %v2305
          %2323 = vmatprep.subr.mxu0 0.0
          %2324 = vmatpush1.msra.mxu0 %v2306
          %2325 = vmatprep.subr.mxu0 0.0
          %2326 = vmatpush1.msra.mxu0 0.0
          %2327 = vmatprep.subr.mxu0 0.0
          %2328 = vmatpush1.msra.mxu0 0.0
          %2329 = vmatprep.subr.mxu0 0.0
          %2330 = vmatpush1.msra.mxu0 0.0
          %2331 = vmatprep.subr.mxu0 0.0
          %2332 = vmatpush1.msra.mxu0 0.0
          %2333 = vmatprep.subr.mxu0 0.0
          %2334 = vmatpush1.msra.mxu0 0.0
          %2335 = vmatprep.subr.mxu0 0.0
          %2336 = vmatpush1.msra.mxu0 0.0
          %2337 = vmatprep.subr.mxu0 0.0
          %2338 = vmatpush1.msra.mxu0 0.0
          %2339 = vmatprep.subr.mxu0 0.0
          %2340 = vmatpush1.msra.mxu0 0.0
          %2341 = vmatprep.subr.mxu0 0.0
          %2342 = vmatpush1.msra.mxu0 0.0
          %2343 = vmatprep.subr.mxu0 0.0
          %2344 = vmatpush1.msra.mxu0 0.0
          %2345 = vmatprep.subr.mxu0 0.0
          %2346 = vmatpush1.msra.mxu0 0.0
          %2347 = vmatprep.subr.mxu0 0.0
          %2348 = vmatpush1.msra.mxu0 0.0
          %2349 = vmatprep.subr.mxu0 0.0
          %2350 = vmatpush1.msra.mxu0 0.0
          %2351 = vmatprep.subr.mxu0 0.0
          %2352 = vmatpush1.msra.mxu0 0.0
          %2353 = vmatprep.subr.mxu0 0.0
          %2354 = vmatpush1.msra.mxu0 0.0
          %2355 = vmatprep.subr.mxu0 0.0
          %2356 = vmatpush1.msra.mxu0 0.0
          %2357 = vmatprep.subr.mxu0 0.0
          %2358 = vmatpush1.msra.mxu0 0.0
          %2359 = vmatprep.subr.mxu0 0.0
          %2360 = vmatpush1.msra.mxu0 0.0
          %2361 = vmatprep.subr.mxu0 0.0
          %2362 = vmatpush1.msra.mxu0 0.0
          %2363 = vmatprep.subr.mxu0 0.0
          %2364 = vmatpush1.msra.mxu0 0.0
          %2365 = vmatprep.subr.mxu0 0.0
          %2366 = vmatpush1.msra.mxu0 0.0
          %2367 = vmatprep.subr.mxu0 0.0
          %2368 = vmatpush1.msra.mxu0 0.0
          %2369 = vmatprep.subr.mxu0 0.0
          %2370 = vmatpush1.msra.mxu0 0.0
          %2371 = vmatprep.subr.mxu0 0.0
          %2372 = vmatpush1.msra.mxu0 0.0
          %2373 = vmatprep.subr.mxu0 0.0
          %2374 = vmatpush1.msra.mxu0 0.0
          %2375 = vmatprep.subr.mxu0 0.0
          %2376 = vmatpush1.msra.mxu0 0.0
          %2377 = vmatprep.subr.mxu0 0.0
          %2378 = vmatpush1.msra.mxu0 0.0
          %2379 = vmatprep.subr.mxu0 0.0
          %2380 = vmatpush1.msra.mxu0 0.0
          %2381 = vmatprep.mubr.f32.mxu0 0.0
          %2382 = vmatmul.mubr.f32.gmra.mrb[0].mxu0 %v2315
          %v2383 = vpop.f32.mrb[0].mxu0
          %v2384 = vadd.f32 %v2312, %v2383
          %v2385 = vpop.f32.mrb[0].mxu0
          %2386 = vdwg.mxu0
          %vm2387 = vcmask 31744
          %2388 = vst.msk [vmem:[%s963] sm:$0xff] %vm2387, %v2384
        $region120: #{tpu_custom_call.1} parent=103 // pred_fallthru
          _
        %p2389 = scmp.lt.s32.totalorder %s42, 1
        %s2390 = scalar_select %p2389, %s42, 1
        %s2391 = smul.addr %s2390, 8
        %s2392 = scalar_lea.vmem %s21, %s2391
        // Predicated region
        $region121: #{tpu_custom_call.1} parent=103 // pred_check
          %p2393 = pneg %p594
        $region122: #{tpu_custom_call.1} parent=103 // pred_check_branch
          %2395 = sbr.rel (%p2393) target = $region124
        $region123: #{tpu_custom_call.1} parent=103 // pred_region
          _
        $region124: #{tpu_custom_call.1} parent=103 // pred_fallthru
          _
      $region104: #{tpu_custom_call.1} parent=5 // pred_fallthru
        _
      %p2396 = scmp.le.s32.totalorder 2, %s33
      // Predicated region
      $region125: #{tpu_custom_call.1} parent=5 // pred_check
        %p2397 = pneg %p2396
      $region126: #{tpu_custom_call.1} parent=5 // pred_check_branch
        %2399 = sbr.rel (%p2397) target = $region128
      $region127: #{tpu_custom_call.1} parent=5 // pred_region
        %s2400 = ssub.s32 %s33, 2
        // Predicated region
        $region129: #{tpu_custom_call.1} parent=127 // pred_check
          %p2401 = pneg %p600
        $region130: #{tpu_custom_call.1} parent=127 // pred_check_branch
          %2403 = sbr.rel (%p2401) target = $region132
        $region131: #{tpu_custom_call.1} parent=127 // pred_region
          %p2404 = scmp.lt.s32.totalorder %s44, 1
          %s2405 = scalar_select %p2404, %s44, 1
          %s2406 = smul.addr %s2405, 8
          %s2407 = scalar_lea.vmem %s21, %s2406
        $region132: #{tpu_custom_call.1} parent=127 // pred_fallthru
          _
      $region128: #{tpu_custom_call.1} parent=5 // pred_fallthru
        _
    $region6: #{tpu_custom_call.1} parent=1 // loop_footer
      %s37 = sadd.s32 1, %s33
    $region7: #{tpu_custom_call.1} parent=1 // loop_footer_branch
      %32 = sbr.rel target = $region3
    $region8: #{tpu_custom_call.1} parent=1 // loop_exit
      _
    %2408 = vsyncpa [#allocation4], 1
    %s2409 = scalar_lea.sflag [#allocation4], 1
    %2410 = vsyncpa %s2409, 1
    %2411 = vsyncpa [#allocation6], 1
    %s2412 = scalar_lea.sflag [#allocation6], 1
    %2413 = vsyncpa %s2412, 1

</llo_original>
